<compile_context>
chip_gen: v7x
topology: tpu7x:2x2x1
jax: 0.10.0
libtpu: 0.0.40
codegen_flags: <defaults>
</compile_context>

<pallas_src>
import math

import jax
import jax.numpy as jnp
from jax.experimental import pallas as pl
from jax.experimental.pallas import tpu as pltpu


def _round_up(x, m):
    return ((x + m - 1) // m) * m


# -----------------------------------------------------------------------------
# Pallas kernel
# -----------------------------------------------------------------------------
def tasa_fused_kernel(x_ref, w_sk_ref, w_lg_ref, w_out_ref, b_ref, o_ref):
    """Fused CityAdaptationMechanism + (shared+private) projection + ln_f.

    Per row-tile (TM rows):
      s     = ReLU(LayerNorm(x @ w_sk + b_sk))          # shared knowledge
      sg    = s @ [A@B | W_gate]                        # single N=128 MXU pass
      spec  = s + sg[:, :64]                            # residual LoRA (f32 add)
      gate  = sigmoid(sg[:, 64:] + bg)
      fused = spec + gate * (s - spec)                   # == gate*s + (1-gate)*spec
      h     = fused @ (wsh + wpr) + (bsh + bpr)
      out   = LayerNorm(h) * gf + bf                     # bf16 store
    """
    x = x_ref[...]                                                   # (TM, 64) bf16

    b_sk = b_ref[0:1, :]
    g1 = b_ref[1:2, :]
    be1 = b_ref[2:3, :]
    bg = b_ref[3:4, :]
    b_out = b_ref[4:5, :]
    gf = b_ref[5:6, :]
    bf_ = b_ref[6:7, :]

    # shared_knowledge = ReLU(LayerNorm(Linear(x)))  (w_in already folded in)
    s = jnp.dot(x, w_sk_ref[...], preferred_element_type=jnp.float32) + b_sk
    mu = jnp.mean(s, axis=-1, keepdims=True)
    var = jnp.maximum(jnp.mean(s * s, axis=-1, keepdims=True) - mu * mu, 0.0)
    s = (s - mu) * jax.lax.rsqrt(var + 1e-5) * g1 + be1
    s = jnp.maximum(s, 0.0)
    s_b = s.astype(jnp.bfloat16)

    # one lane-dense matmul for LoRA delta and fusion gate: (TM,64) @ (64,128)
    sg = jnp.dot(s_b, w_lg_ref[...], preferred_element_type=jnp.float32)
    n = sg.shape[-1] // 2
    spec = s + sg[:, :n]                        # city_specific (residual in f32)
    gate = jax.nn.sigmoid(sg[:, n:] + bg)
    fused = spec + gate * (s - spec)

    # shared_proj + private_proj folded (attention blocks are identity, see TODO)
    h = jnp.dot(fused.astype(jnp.bfloat16), w_out_ref[...],
                preferred_element_type=jnp.float32) + b_out

    # ln_f (one-pass)
    mu2 = jnp.mean(h, axis=-1, keepdims=True)
    var2 = jnp.maximum(jnp.mean(h * h, axis=-1, keepdims=True) - mu2 * mu2, 0.0)
    o_ref[...] = ((h - mu2) * jax.lax.rsqrt(var2 + 1e-5) * gf + bf_).astype(o_ref.dtype)


# -----------------------------------------------------------------------------
# Wrapper around pallas_call
# -----------------------------------------------------------------------------
def run_fused(x2d_bf16, kp, tile_m):
    M_pad, d_in = x2d_bf16.shape
    n_embd = kp["w_out"].shape[1]
    assert M_pad % tile_m == 0

    in_specs = [
        pl.BlockSpec((tile_m, d_in), lambda i: (i, 0)),      # x row-tile (bf16)
        pl.BlockSpec(kp["w_sk"].shape, lambda i: (0, 0)),    # (64, 64)
        pl.BlockSpec(kp["w_lg"].shape, lambda i: (0, 0)),    # (64, 128)
        pl.BlockSpec(kp["w_out"].shape, lambda i: (0, 0)),   # (64, 64)
        pl.BlockSpec(kp["bias_pack"].shape, lambda i: (0, 0)),  # (8, 64) f32
    ]
    out_spec = pl.BlockSpec((tile_m, n_embd), lambda i: (i, 0))

    return pl.pallas_call(
        tasa_fused_kernel,
        out_shape=jax.ShapeDtypeStruct((M_pad, n_embd), jnp.bfloat16),
        grid_spec=pltpu.PrefetchScalarGridSpec(
            num_scalar_prefetch=0,
            grid=(M_pad // tile_m,),
            in_specs=in_specs,
            out_specs=out_spec,
        ),
        compiler_params=pltpu.CompilerParams(
            dimension_semantics=("parallel",)),    # independent row tiles -> megacore
    )(x2d_bf16, kp["w_sk"], kp["w_lg"], kp["w_out"], kp["bias_pack"])


def _choose_tile_m(m_pad):
    # Largest tile that divides M_pad, keeps >= 2 grid steps where possible
    # (v7x megacore), and stays far under v7x's 64 MiB VMEM (4096 rows of the
    # bf16 input + f32 intermediates is a few MiB per buffer).
    for cand in (4096, 2048, 1024, 512, 256):
        if m_pad % cand == 0 and m_pad // cand >= 2:
            return cand
    return m_pad


def pack_kernel_params(p, d_in_pad):
    """Fold the linear algebra at trace time (f32, exact) and cast to bf16."""
    n_embd = p["w_sk"].shape[1]
    emb_main = p["w_in"].shape[1]                      # 64

    # fold the 1->64 input projection into w_sk (rank-1 in the raw value)
    w_sk_main = p["w_sk"][:emb_main]                   # (64, 64)
    w_sk_rest = p["w_sk"][emb_main:]                   # (60, 64)
    w_row = p["w_in"][0] @ w_sk_main                   # (64,)
    b_fold = p["b_in"] @ w_sk_main                     # (64,)
    w_sk_folded = jnp.concatenate([w_row[None, :], w_sk_rest], axis=0)   # (61, 64)
    d_in = w_sk_folded.shape[0]
    if d_in_pad != d_in:
        w_sk_folded = jnp.concatenate(
            [w_sk_folded, jnp.zeros((d_in_pad - d_in, n_embd), jnp.float32)], axis=0)

    # LoRA delta + folded fusion gate packed into one (64, 128) operand
    w_delta = p["lora_a"] @ p["lora_b"]                          # (64, 64)
    w_gate = p["wg1"] + p["wg2"] + w_delta @ p["wg2"]            # (64, 64)
    w_lg = jnp.concatenate([w_delta, w_gate], axis=1)            # (64, 128)

    # shared + private projection folded (attention blocks are identity)
    w_out = p["wsh"] + p["wpr"]
    b_out = p["bsh"] + p["bpr"]
    b_sk = p["b_sk"] + b_fold[None, :]

    bias_pack = jnp.concatenate(
        [b_sk, p["g1"], p["be1"], p["bg"], b_out, p["gf"], p["bf"],
         jnp.zeros((1, n_embd), jnp.float32)], axis=0)           # (8, 64) f32

    return {
        "w_sk": w_sk_folded.astype(jnp.bfloat16),
        "w_lg": w_lg.astype(jnp.bfloat16),
        "w_out": w_out.astype(jnp.bfloat16),
        "bias_pack": bias_pack,
    }


# -----------------------------------------------------------------------------
# Parameters (deterministic init matching the PyTorch config defaults)
# -----------------------------------------------------------------------------
def xavier_uniform(key, shape, fan_in, fan_out):
    a = math.sqrt(6.0 / (fan_in + fan_out))
    return jax.random.uniform(key, shape, jnp.float32, -a, a)


def init_params(key, *, num_nodes, seq_len, n_embd=64, input_dim=1,
                tod_dim=12, dow_dim=6, spatial_dim=6, adaptive_dim=36,
                steps_per_day=288, lora_rank=16, horizons=(3, 6, 12)):
    emb_dim = n_embd + tod_dim + dow_dim + spatial_dim + adaptive_dim   # 124
    keys = jax.random.split(key, 16)
    p = {}
    # OptimizedSTAE
    p["w_in"] = xavier_uniform(keys[0], (input_dim, n_embd), input_dim, n_embd)
    p["b_in"] = jnp.zeros((n_embd,), jnp.float32)
    p["tod_table"] = 0.02 * jax.random.normal(keys[1], (steps_per_day, tod_dim), jnp.float32)
    p["dow_table"] = 0.02 * jax.random.normal(keys[2], (7, dow_dim), jnp.float32)
    p["node_emb"] = xavier_uniform(keys[3], (num_nodes, spatial_dim), num_nodes, spatial_dim)
    p["adp_emb"] = xavier_uniform(keys[4], (seq_len, num_nodes, adaptive_dim),
                                  num_nodes * adaptive_dim, seq_len * adaptive_dim)
    # CityAdaptationMechanism
    p["w_sk"] = xavier_uniform(keys[5], (emb_dim, n_embd), emb_dim, n_embd)
    p["b_sk"] = jnp.zeros((1, n_embd), jnp.float32)
    p["g1"] = jnp.ones((1, n_embd), jnp.float32)
    p["be1"] = jnp.zeros((1, n_embd), jnp.float32)
    p["lora_a"] = xavier_uniform(keys[6], (n_embd, lora_rank), n_embd, lora_rank)
    p["lora_b"] = xavier_uniform(keys[7], (lora_rank, n_embd), lora_rank, n_embd)
    wg = xavier_uniform(keys[8], (2 * n_embd, n_embd), 2 * n_embd, n_embd)
    p["wg1"], p["wg2"] = wg[:n_embd], wg[n_embd:]
    p["bg"] = jnp.zeros((1, n_embd), jnp.float32)
    # shared / private projections
    p["wsh"] = xavier_uniform(keys[9], (n_embd, n_embd), n_embd, n_embd)
    p["bsh"] = jnp.zeros((1, n_embd), jnp.float32)
    p["wpr"] = xavier_uniform(keys[10], (n_embd, n_embd), n_embd, n_embd)
    p["bpr"] = jnp.zeros((1, n_embd), jnp.float32)
    # ln_f
    p["gf"] = jnp.ones((1, n_embd), jnp.float32)
    p["bf"] = jnp.zeros((1, n_embd), jnp.float32)
    # predictors (concatenated over horizons)
    w_preds, b_preds = [], []
    for i, h in enumerate(horizons):
        w_preds.append(xavier_uniform(jax.random.fold_in(keys[11], i),
                                      (n_embd, h), n_embd, h))
        b_preds.append(jnp.zeros((h,), jnp.float32))
    p["w_pred"] = jnp.concatenate(w_preds, axis=1)
    p["b_pred"] = jnp.concatenate(b_preds)[None, :]
    return p


# -----------------------------------------------------------------------------
# Forward pass (Pallas hot path on the last time step only)
# -----------------------------------------------------------------------------
def optimized_tasa_forward(x, params, *, input_dim=1, steps_per_day=288,
                           horizons=(3, 6, 12)):
    B, T, N, C = x.shape
    n_embd = params["w_sk"].shape[1]

    # Only h_final[:, -1] is consumed and the attention blocks are identity
    # (see TODO at top), so build embeddings for the last time step only.
    x_last = x[:, -1]                                               # (B, N, C)
    value = x_last[..., :input_dim]                                 # (B, N, 1)
    tod_idx = jnp.clip((x_last[..., input_dim] * steps_per_day).astype(jnp.int32),
                       0, steps_per_day - 1)
    dow_idx = jnp.clip(x_last[..., input_dim + 1].astype(jnp.int32), 0, 6)
    feats = [
        value,                                                      # raw value; w_in folded into w_sk
        params["tod_table"][tod_idx],                               # (B, N, 12)
        params["dow_table"][dow_idx],                               # (B, N, 6)
        jnp.broadcast_to(params["node_emb"][None],
                         (B, N, params["node_emb"].shape[-1])),     # (B, N, 6)
        jnp.broadcast_to(params["adp_emb"][T - 1][None],
                         (B, N, params["adp_emb"].shape[-1])),      # (B, N, 36)
    ]
    # cast to bf16 BEFORE concat/pad so the staged XLA->Pallas buffer is bf16
    x_emb = jnp.concatenate([f.astype(jnp.bfloat16) for f in feats], axis=-1)
    d_in = x_emb.shape[-1]                                          # 61
    d_pad = 64 if d_in <= 64 else _round_up(d_in, 128)

    kp = pack_kernel_params(params, d_pad)                          # trace-time folds

    M = B * N
    x2d = x_emb.reshape(M, d_in)
    if d_pad != d_in:
        x2d = jnp.concatenate(
            [x2d, jnp.zeros((M, d_pad - d_in), x2d.dtype)], axis=-1)
    M_pad = _round_up(M, 256)
    if M_pad != M:
        x2d = jnp.concatenate(
            [x2d, jnp.zeros((M_pad - M, d_pad), x2d.dtype)], axis=0)
    tile_m = _choose_tile_m(M_pad)

    h_last = run_fused(x2d, kp, tile_m)[:M].astype(jnp.float32)     # (B*N, 64)

    # ---- tiny horizon predictors: leave to XLA ------------------------------
    pred_all = h_last @ params["w_pred"] + params["b_pred"]         # (B*N, sum(h))
    pred_all = pred_all.reshape(B, N, -1)
    preds, off = {}, 0
    for h in horizons:
        out = pred_all[:, :, off:off + h]                           # (B, N, h)
        preds[h] = jnp.transpose(out, (0, 2, 1))                    # (B, h, N)
        off += h
    return preds


# -----------------------------------------------------------------------------
# Pure-f32, unfolded JAX reference (mirrors the PyTorch module structure)
# -----------------------------------------------------------------------------
def reference_forward(x, p, *, input_dim=1, steps_per_day=288, horizons=(3, 6, 12)):
    B, T, N, C = x.shape
    main = x[..., :input_dim] @ p["w_in"] + p["b_in"]
    tod_idx = jnp.clip((x[..., input_dim] * steps_per_day).astype(jnp.int32),
                       0, steps_per_day - 1)
    dow_idx = jnp.clip(x[..., input_dim + 1].astype(jnp.int32), 0, 6)
    x_emb = jnp.concatenate([
        main,
        p["tod_table"][tod_idx],
        p["dow_table"][dow_idx],
        jnp.broadcast_to(p["node_emb"][None, None], (B, T, N, p["node_emb"].shape[-1])),
        jnp.broadcast_to(p["adp_emb"][None], (B, T, N, p["adp_emb"].shape[-1])),
    ], axis=-1)

    def ln(v, g, b):
        mu = jnp.mean(v, -1, keepdims=True)
        var = jnp.mean(jnp.square(v - mu), -1, keepdims=True)
        return (v - mu) * jax.lax.rsqrt(var + 1e-5) * g + b

    s = jnp.maximum(ln(x_emb @ p["w_sk"] + p["b_sk"], p["g1"], p["be1"]), 0.0)
    spec = s + (s @ p["lora_a"]) @ p["lora_b"]
    gate = jax.nn.sigmoid(s @ p["wg1"] + spec @ p["wg2"] + p["bg"])
    fused = gate * s + (1.0 - gate) * spec
    h_sh = fused @ p["wsh"] + p["bsh"]
    h_pr = fused @ p["wpr"] + p["bpr"]
    # TODO(synk): temporal/spatial attention blocks treated as identity (defs not provided)
    h_final = ln(h_sh + h_pr, p["gf"], p["bf"])
    h_last = h_final[:, -1].reshape(B * N, -1)
    pred_all = (h_last @ p["w_pred"] + p["b_pred"]).reshape(B, N, -1)
    preds, off = {}, 0
    for h in horizons:
        preds[h] = jnp.transpose(pred_all[:, :, off:off + h], (0, 2, 1))
        off += h
    return preds


# -----------------------------------------------------------------------------
# Main
# -----------------------------------------------------------------------------
if __name__ == "__main__":
    B, T, N, C = 2, 8, 16, 3          # small shapes: seq_len=8, num_nodes=16
    horizons = (3, 6, 12)

    key = jax.random.PRNGKey(0)
    k_param, k_val, k_tod, k_dow = jax.random.split(key, 4)

    params = init_params(k_param, num_nodes=N, seq_len=T, horizons=horizons)

    value = jax.random.normal(k_val, (B, T, N, 1), jnp.float32)
    tod = jax.random.uniform(k_tod, (B, T, N, 1), jnp.float32)            # [0,1)
    dow = jax.random.randint(k_dow, (B, T, N, 1), 0, 7).astype(jnp.float32)
    x = jnp.concatenate([value, tod, dow], axis=-1)                       # (B,T,N,3)

    fwd = jax.jit(lambda xx: optimized_tasa_forward(xx, params, horizons=horizons))
    preds = fwd(x)
    jax.block_until_ready(preds)

    ref = reference_forward(x, params, horizons=horizons)

    ok = True
    for h in horizons:
        assert preds[h].shape == (B, h, N), preds[h].shape
        assert bool(jnp.all(jnp.isfinite(preds[h])))
        err = float(jnp.max(jnp.abs(preds[h] - ref[h])))
        if err > 0.3:                                  # generous bf16 tolerance
            ok = False
            print(f"horizon {h}: max abs err {err:.4f} exceeds tolerance")
    if ok:
        print("KERNEL_OK")
</pallas_src>

<mosaic_0001>
module attributes {stable_mosaic.version = 11 : i64} {
  func.func @tasa_fused_kernel(%arg0: i32, %arg1: memref<256x64xbf16, #tpu.memory_space<vmem>>, %arg2: memref<64x64xbf16, #tpu.memory_space<vmem>>, %arg3: memref<64x128xbf16, #tpu.memory_space<vmem>>, %arg4: memref<64x64xbf16, #tpu.memory_space<vmem>>, %arg5: memref<8x64xf32, #tpu.memory_space<vmem>>, %arg6: memref<256x64xbf16, #tpu.memory_space<vmem>>) attributes {dimension_semantics = [#tpu.dimension_semantics<parallel>], iteration_bounds = array<i64: 1>, scalar_prefetch = 0 : i64, scratch_operands = 0 : i64, tpu.core_type = #tpu.core_type<tc>, window_params = [{transform_indices = @transform_0, window_bounds = array<i64: 256, 64>}, {pipeline_mode = #tpu.pipeline_mode<synchronous>, transform_indices = @transform_1, window_bounds = array<i64: 64, 64>}, {pipeline_mode = #tpu.pipeline_mode<synchronous>, transform_indices = @transform_2, window_bounds = array<i64: 64, 128>}, {pipeline_mode = #tpu.pipeline_mode<synchronous>, transform_indices = @transform_3, window_bounds = array<i64: 64, 64>}, {pipeline_mode = #tpu.pipeline_mode<synchronous>, transform_indices = @transform_4, window_bounds = array<i64: 8, 64>}, {transform_indices = @transform_5, window_bounds = array<i64: 256, 64>}]} {
    %c0 = arith.constant 0 : index
    %c0_0 = arith.constant 0 : index
    %0 = vector.load %arg1[%c0, %c0_0] : memref<256x64xbf16, #tpu.memory_space<vmem>>, vector<256x64xbf16>
    %c0_1 = arith.constant 0 : index
    %c0_2 = arith.constant 0 : index
    %1 = vector.load %arg5[%c0_1, %c0_2] : memref<8x64xf32, #tpu.memory_space<vmem>>, vector<1x64xf32>
    %c1 = arith.constant 1 : index
    %c0_3 = arith.constant 0 : index
    %2 = vector.load %arg5[%c1, %c0_3] : memref<8x64xf32, #tpu.memory_space<vmem>>, vector<1x64xf32>
    %c2 = arith.constant 2 : index
    %c0_4 = arith.constant 0 : index
    %3 = vector.load %arg5[%c2, %c0_4] : memref<8x64xf32, #tpu.memory_space<vmem>>, vector<1x64xf32>
    %c3 = arith.constant 3 : index
    %c0_5 = arith.constant 0 : index
    %4 = vector.load %arg5[%c3, %c0_5] : memref<8x64xf32, #tpu.memory_space<vmem>>, vector<1x64xf32>
    %c4 = arith.constant 4 : index
    %c0_6 = arith.constant 0 : index
    %5 = vector.load %arg5[%c4, %c0_6] : memref<8x64xf32, #tpu.memory_space<vmem>>, vector<1x64xf32>
    %c5 = arith.constant 5 : index
    %c0_7 = arith.constant 0 : index
    %6 = vector.load %arg5[%c5, %c0_7] : memref<8x64xf32, #tpu.memory_space<vmem>>, vector<1x64xf32>
    %c6 = arith.constant 6 : index
    %c0_8 = arith.constant 0 : index
    %7 = vector.load %arg5[%c6, %c0_8] : memref<8x64xf32, #tpu.memory_space<vmem>>, vector<1x64xf32>
    %c0_9 = arith.constant 0 : index
    %c0_10 = arith.constant 0 : index
    %8 = vector.load %arg2[%c0_9, %c0_10] : memref<64x64xbf16, #tpu.memory_space<vmem>>, vector<64x64xbf16>
    %cst = arith.constant dense<0.000000e+00> : vector<256x64xf32>
    %9 = tpu.matmul %0, %8, %cst {dimension_numbers = #tpu.dot_dimension_numbers<[1], [0], [0], [1], [0, 0, 1, 1], [], []>} : vector<256x64xbf16>, vector<64x64xbf16>, vector<256x64xf32> -> vector<256x64xf32>
    %10 = vector.broadcast %1 : vector<1x64xf32> to vector<256x64xf32>
    %11 = arith.addf %9, %10 : vector<256x64xf32>
    %cst_11 = arith.constant dense<0.000000e+00> : vector<256xf32>
    %12 = vector.multi_reduction <add>, %11, %cst_11 [1] : vector<256x64xf32> to vector<256xf32>
    %13 = vector.shape_cast %12 : vector<256xf32> to vector<256x1xf32>
    %cst_12 = arith.constant 6.400000e+01 : f32
    %14 = vector.broadcast %cst_12 : f32 to vector<256x1xf32>
    %15 = arith.divf %13, %14 : vector<256x1xf32>
    %16 = arith.mulf %11, %11 : vector<256x64xf32>
    %cst_13 = arith.constant dense<0.000000e+00> : vector<256xf32>
    %17 = vector.multi_reduction <add>, %16, %cst_13 [1] : vector<256x64xf32> to vector<256xf32>
    %18 = vector.shape_cast %17 : vector<256xf32> to vector<256x1xf32>
    %cst_14 = arith.constant 6.400000e+01 : f32
    %19 = vector.broadcast %cst_14 : f32 to vector<256x1xf32>
    %20 = arith.divf %18, %19 : vector<256x1xf32>
    %21 = arith.mulf %15, %15 : vector<256x1xf32>
    %22 = arith.subf %20, %21 : vector<256x1xf32>
    %cst_15 = arith.constant 0.000000e+00 : f32
    %23 = vector.broadcast %cst_15 : f32 to vector<256x1xf32>
    %24 = arith.maximumf %22, %23 : vector<256x1xf32>
    %25 = vector.broadcast %15 : vector<256x1xf32> to vector<256x64xf32>
    %26 = arith.subf %11, %25 : vector<256x64xf32>
    %cst_16 = arith.constant 9.99999974E-6 : f32
    %27 = vector.broadcast %cst_16 : f32 to vector<256x1xf32>
    %28 = arith.addf %24, %27 : vector<256x1xf32>
    %29 = math.rsqrt %28 : vector<256x1xf32>
    %30 = vector.broadcast %29 : vector<256x1xf32> to vector<256x64xf32>
    %31 = arith.mulf %26, %30 : vector<256x64xf32>
    %32 = vector.broadcast %2 : vector<1x64xf32> to vector<256x64xf32>
    %33 = arith.mulf %31, %32 : vector<256x64xf32>
    %34 = vector.broadcast %3 : vector<1x64xf32> to vector<256x64xf32>
    %35 = arith.addf %33, %34 : vector<256x64xf32>
    %cst_17 = arith.constant 0.000000e+00 : f32
    %36 = vector.broadcast %cst_17 : f32 to vector<256x64xf32>
    %37 = arith.maximumf %35, %36 : vector<256x64xf32>
    %38 = arith.truncf %37 : vector<256x64xf32> to vector<256x64xbf16>
    %c0_18 = arith.constant 0 : index
    %c0_19 = arith.constant 0 : index
    %39 = vector.load %arg3[%c0_18, %c0_19] : memref<64x128xbf16, #tpu.memory_space<vmem>>, vector<64x128xbf16>
    %cst_20 = arith.constant dense<0.000000e+00> : vector<256x128xf32>
    %40 = tpu.matmul %38, %39, %cst_20 {dimension_numbers = #tpu.dot_dimension_numbers<[1], [0], [0], [1], [0, 0, 1, 1], [], []>} : vector<256x64xbf16>, vector<64x128xbf16>, vector<256x128xf32> -> vector<256x128xf32>
    %41 = vector.extract_strided_slice %40 {offsets = [0, 0], sizes = [256, 64], strides = [1, 1]} : vector<256x128xf32> to vector<256x64xf32>
    %42 = arith.addf %37, %41 : vector<256x64xf32>
    %43 = vector.extract_strided_slice %40 {offsets = [0, 64], sizes = [256, 64], strides = [1, 1]} : vector<256x128xf32> to vector<256x64xf32>
    %44 = vector.broadcast %4 : vector<1x64xf32> to vector<256x64xf32>
    %45 = arith.addf %43, %44 : vector<256x64xf32>
    %46 = arith.negf %45 : vector<256x64xf32>
    %47 = math.exp %46 : vector<256x64xf32>
    %cst_21 = arith.constant 1.000000e+00 : f32
    %48 = vector.broadcast %cst_21 : f32 to vector<256x64xf32>
    %49 = arith.addf %48, %47 : vector<256x64xf32>
    %50 = arith.divf %48, %49 : vector<256x64xf32>
    %51 = arith.subf %37, %42 : vector<256x64xf32>
    %52 = arith.mulf %50, %51 : vector<256x64xf32>
    %53 = arith.addf %42, %52 : vector<256x64xf32>
    %54 = arith.truncf %53 : vector<256x64xf32> to vector<256x64xbf16>
    %c0_22 = arith.constant 0 : index
    %c0_23 = arith.constant 0 : index
    %55 = vector.load %arg4[%c0_22, %c0_23] : memref<64x64xbf16, #tpu.memory_space<vmem>>, vector<64x64xbf16>
    %cst_24 = arith.constant dense<0.000000e+00> : vector<256x64xf32>
    %56 = tpu.matmul %54, %55, %cst_24 {dimension_numbers = #tpu.dot_dimension_numbers<[1], [0], [0], [1], [0, 0, 1, 1], [], []>} : vector<256x64xbf16>, vector<64x64xbf16>, vector<256x64xf32> -> vector<256x64xf32>
    %57 = vector.broadcast %5 : vector<1x64xf32> to vector<256x64xf32>
    %58 = arith.addf %56, %57 : vector<256x64xf32>
    %cst_25 = arith.constant dense<0.000000e+00> : vector<256xf32>
    %59 = vector.multi_reduction <add>, %58, %cst_25 [1] : vector<256x64xf32> to vector<256xf32>
    %60 = vector.shape_cast %59 : vector<256xf32> to vector<256x1xf32>
    %cst_26 = arith.constant 6.400000e+01 : f32
    %61 = vector.broadcast %cst_26 : f32 to vector<256x1xf32>
    %62 = arith.divf %60, %61 : vector<256x1xf32>
    %63 = arith.mulf %58, %58 : vector<256x64xf32>
    %cst_27 = arith.constant dense<0.000000e+00> : vector<256xf32>
    %64 = vector.multi_reduction <add>, %63, %cst_27 [1] : vector<256x64xf32> to vector<256xf32>
    %65 = vector.shape_cast %64 : vector<256xf32> to vector<256x1xf32>
    %cst_28 = arith.constant 6.400000e+01 : f32
    %66 = vector.broadcast %cst_28 : f32 to vector<256x1xf32>
    %67 = arith.divf %65, %66 : vector<256x1xf32>
    %68 = arith.mulf %62, %62 : vector<256x1xf32>
    %69 = arith.subf %67, %68 : vector<256x1xf32>
    %cst_29 = arith.constant 0.000000e+00 : f32
    %70 = vector.broadcast %cst_29 : f32 to vector<256x1xf32>
    %71 = arith.maximumf %69, %70 : vector<256x1xf32>
    %72 = vector.broadcast %62 : vector<256x1xf32> to vector<256x64xf32>
    %73 = arith.subf %58, %72 : vector<256x64xf32>
    %cst_30 = arith.constant 9.99999974E-6 : f32
    %74 = vector.broadcast %cst_30 : f32 to vector<256x1xf32>
    %75 = arith.addf %71, %74 : vector<256x1xf32>
    %76 = math.rsqrt %75 : vector<256x1xf32>
    %77 = vector.broadcast %76 : vector<256x1xf32> to vector<256x64xf32>
    %78 = arith.mulf %73, %77 : vector<256x64xf32>
    %79 = vector.broadcast %6 : vector<1x64xf32> to vector<256x64xf32>
    %80 = arith.mulf %78, %79 : vector<256x64xf32>
    %81 = vector.broadcast %7 : vector<1x64xf32> to vector<256x64xf32>
    %82 = arith.addf %80, %81 : vector<256x64xf32>
    %83 = arith.truncf %82 : vector<256x64xf32> to vector<256x64xbf16>
    %c0_31 = arith.constant 0 : index
    %c0_32 = arith.constant 0 : index
    %84 = vector.load %arg6[%c0_31, %c0_32] : memref<256x64xbf16, #tpu.memory_space<vmem>>, vector<256x64xbf16>
    tpu.vector_store %arg6[%c0_31, %c0_32], %83 {strides = array<i32>} : memref<256x64xbf16, #tpu.memory_space<vmem>>, vector<256x64xbf16>,
    return
  }
  func.func @transform_0(%arg0: i32) -> (i32, i32) {
    %c0_i32 = arith.constant 0 : i32
    %c0_i32_0 = arith.constant 0 : i32
    return %arg0, %c0_i32 : i32, i32
  }
  func.func @transform_1(%arg0: i32) -> (i32, i32) {
    %c0_i32 = arith.constant 0 : i32
    %c0_i32_0 = arith.constant 0 : i32
    %c0_i32_1 = arith.constant 0 : i32
    return %c0_i32, %c0_i32_0 : i32, i32
  }
  func.func @transform_2(%arg0: i32) -> (i32, i32) {
    %c0_i32 = arith.constant 0 : i32
    %c0_i32_0 = arith.constant 0 : i32
    %c0_i32_1 = arith.constant 0 : i32
    return %c0_i32, %c0_i32_0 : i32, i32
  }
  func.func @transform_3(%arg0: i32) -> (i32, i32) {
    %c0_i32 = arith.constant 0 : i32
    %c0_i32_0 = arith.constant 0 : i32
    %c0_i32_1 = arith.constant 0 : i32
    return %c0_i32, %c0_i32_0 : i32, i32
  }
  func.func @transform_4(%arg0: i32) -> (i32, i32) {
    %c0_i32 = arith.constant 0 : i32
    %c0_i32_0 = arith.constant 0 : i32
    %c0_i32_1 = arith.constant 0 : i32
    return %c0_i32, %c0_i32_0 : i32, i32
  }
  func.func @transform_5(%arg0: i32) -> (i32, i32) {
    %c0_i32 = arith.constant 0 : i32
    %c0_i32_0 = arith.constant 0 : i32
    return %arg0, %c0_i32 : i32, i32
  }
}

</mosaic_0001>

<llo_original>
// kernel: _lambda_.1
$region0: #{_lambda_.1}
  #allocation0 [shape = 'u32[]', space=smem, size = 0x4, offset = 0x4, fixed_abs, tag = 'smem constant byte address 0x4 - core index']
  #allocation1 [shape = 'u32[144,128]{1,0:T(1,128)}', space=vmem, size = 0x12000, scoped, tag = 'internal scratch']
  %s0 = inlined_call_operand.vmem [shape: bf16[256,64], index: 0, kind: input, shape index: {}]
  %s1 = inlined_call_operand.vmem [shape: bf16[64,64], index: 1, kind: input, shape index: {}]
  %s2 = inlined_call_operand.vmem [shape: bf16[64,128], index: 2, kind: input, shape index: {}]
  %s3 = inlined_call_operand.vmem [shape: bf16[64,64], index: 3, kind: input, shape index: {}]
  %s4 = inlined_call_operand.vmem [shape: f32[8,64], index: 4, kind: input, shape index: {}]
  %s5 = inlined_call_operand.vmem [shape: bf16[256,64], index: 5, kind: output, shape index: {}]
  %s6 = sld [smem:[#allocation0]]
  $region30: #{_lambda_.1} parent=0
    _
  %s8 = ssub.s32 1, %s6
  %s9 = scalar_select 0, %s8, %s6
  // Predicated region
  $region2: #{_lambda_.1} parent=0 // pred_check
    _
  $region3: #{_lambda_.1} parent=0 // pred_check_branch
    %11 = sbr.rel (0) target = $region5
  $region4: #{_lambda_.1} parent=0 // pred_region
    _
  $region5: #{_lambda_.1} parent=0 // pred_fallthru
    _
  // Predicated region
  $region6: #{_lambda_.1} parent=0 // pred_check
    _
  $region7: #{_lambda_.1} parent=0 // pred_check_branch
    %13 = sbr.rel (0) target = $region9
  $region8: #{_lambda_.1} parent=0 // pred_region
    _
  $region9: #{_lambda_.1} parent=0 // pred_fallthru
    _
  // Predicated region
  $region10: #{_lambda_.1} parent=0 // pred_check
    _
  $region11: #{_lambda_.1} parent=0 // pred_check_branch
    %15 = sbr.rel (0) target = $region13
  $region12: #{_lambda_.1} parent=0 // pred_region
    _
  $region13: #{_lambda_.1} parent=0 // pred_fallthru
    _
  // Predicated region
  $region14: #{_lambda_.1} parent=0 // pred_check
    _
  $region15: #{_lambda_.1} parent=0 // pred_check_branch
    %17 = sbr.rel (0) target = $region17
  $region16: #{_lambda_.1} parent=0 // pred_region
    _
  $region17: #{_lambda_.1} parent=0 // pred_fallthru
    _
  // Predicated region
  $region18: #{_lambda_.1} parent=0 // pred_check
    _
  $region19: #{_lambda_.1} parent=0 // pred_check_branch
    %19 = sbr.rel (0) target = $region21
  $region20: #{_lambda_.1} parent=0 // pred_region
    _
  $region21: #{_lambda_.1} parent=0 // pred_fallthru
    _
  %v21 = vld [vmem:[%s0] sm:$0xf]
  %v22 = vld [vmem:[%s0 + $0x4] sm:$0xf]
  %v23 = vld [vmem:[%s0 + $0x8] sm:$0xf]
  %v24 = vld [vmem:[%s0 + $0xc] sm:$0xf]
  %v25 = vld [vmem:[%s0 + $0x10] sm:$0xf]
  %v26 = vld [vmem:[%s0 + $0x14] sm:$0xf]
  %v27 = vld [vmem:[%s0 + $0x18] sm:$0xf]
  %v28 = vld [vmem:[%s0 + $0x1c] sm:$0xf]
  %v29 = vld [vmem:[%s0 + $0x20] sm:$0xf]
  %v30 = vld [vmem:[%s0 + $0x24] sm:$0xf]
  %v31 = vld [vmem:[%s0 + $0x28] sm:$0xf]
  %v32 = vld [vmem:[%s0 + $0x2c] sm:$0xf]
  %v33 = vld [vmem:[%s0 + $0x30] sm:$0xf]
  %v34 = vld [vmem:[%s0 + $0x34] sm:$0xf]
  %v35 = vld [vmem:[%s0 + $0x38] sm:$0xf]
  %v36 = vld [vmem:[%s0 + $0x3c] sm:$0xf]
  %v37 = vld [vmem:[%s0 + $0x40] sm:$0xf]
  %v38 = vld [vmem:[%s0 + $0x44] sm:$0xf]
  %v39 = vld [vmem:[%s0 + $0x48] sm:$0xf]
  %v40 = vld [vmem:[%s0 + $0x4c] sm:$0xf]
  %v41 = vld [vmem:[%s0 + $0x50] sm:$0xf]
  %v42 = vld [vmem:[%s0 + $0x54] sm:$0xf]
  %v43 = vld [vmem:[%s0 + $0x58] sm:$0xf]
  %v44 = vld [vmem:[%s0 + $0x5c] sm:$0xf]
  %v45 = vld [vmem:[%s0 + $0x60] sm:$0xf]
  %v46 = vld [vmem:[%s0 + $0x64] sm:$0xf]
  %v47 = vld [vmem:[%s0 + $0x68] sm:$0xf]
  %v48 = vld [vmem:[%s0 + $0x6c] sm:$0xf]
  %v49 = vld [vmem:[%s0 + $0x70] sm:$0xf]
  %v50 = vld [vmem:[%s0 + $0x74] sm:$0xf]
  %v51 = vld [vmem:[%s0 + $0x78] sm:$0xf]
  %v52 = vld [vmem:[%s0 + $0x7c] sm:$0xf]
  %v53 = vld [vmem:[%s4] sm:$0x1]
  %v54 = vld [vmem:[%s4 + $0x1] sm:$0x1]
  %v55 = vld [vmem:[%s4 + $0x2] sm:$0x1]
  %v56 = vld [vmem:[%s4 + $0x3] sm:$0x1]
  %v57 = vld [vmem:[%s4 + $0x4] sm:$0x1]
  %v58 = vld [vmem:[%s4 + $0x5] sm:$0x1]
  %v59 = vld [vmem:[%s4 + $0x6] sm:$0x1]
  %v60 = vld [vmem:[%s1] sm:$0xf]
  %v61 = vld [vmem:[%s1 + $0x4] sm:$0xf]
  %v62 = vld [vmem:[%s1 + $0x8] sm:$0xf]
  %v63 = vld [vmem:[%s1 + $0xc] sm:$0xf]
  %v64 = vld [vmem:[%s1 + $0x10] sm:$0xf]
  %v65 = vld [vmem:[%s1 + $0x14] sm:$0xf]
  %v66 = vld [vmem:[%s1 + $0x18] sm:$0xf]
  %v67 = vld [vmem:[%s1 + $0x1c] sm:$0xf]
  %v68 = vlaneseq
  %v69 = vshrl.u32 %v68, 7
  %v70 = vsub.s32 0, %v69
  %v71 = vrot.slane %v53, %v70
  %v104 = vunpack.c.l.b16 %v21
  %v105 = vunpack.c.l.b16 %v22
  %v106 = vunpack.c.l.b16 %v23
  %v107 = vunpack.c.l.b16 %v24
  %v108 = vunpack.c.l.b16 %v25
  %v109 = vunpack.c.l.b16 %v26
  %v110 = vunpack.c.l.b16 %v27
  %v111 = vunpack.c.l.b16 %v28
  %v112 = vunpack.c.l.b16 %v29
  %v113 = vunpack.c.l.b16 %v30
  %v114 = vunpack.c.l.b16 %v31
  %v115 = vunpack.c.l.b16 %v32
  %v116 = vunpack.c.l.b16 %v33
  %v117 = vunpack.c.l.b16 %v34
  %v118 = vunpack.c.l.b16 %v35
  %v119 = vunpack.c.l.b16 %v36
  %v120 = vunpack.c.l.b16 %v37
  %v121 = vunpack.c.l.b16 %v38
  %v122 = vunpack.c.l.b16 %v39
  %v123 = vunpack.c.l.b16 %v40
  %v124 = vunpack.c.l.b16 %v41
  %v125 = vunpack.c.l.b16 %v42
  %v126 = vunpack.c.l.b16 %v43
  %v127 = vunpack.c.l.b16 %v44
  %v128 = vunpack.c.l.b16 %v45
  %v129 = vunpack.c.l.b16 %v46
  %v130 = vunpack.c.l.b16 %v47
  %v131 = vunpack.c.l.b16 %v48
  %v132 = vunpack.c.l.b16 %v49
  %v133 = vunpack.c.l.b16 %v50
  %v134 = vunpack.c.l.b16 %v51
  %v135 = vunpack.c.l.b16 %v52
  %v136 = vpack.c.b16 %v105, %v104
  %v137 = vpack.c.b16 %v107, %v106
  %v138 = vpack.c.b16 %v109, %v108
  %v139 = vpack.c.b16 %v111, %v110
  %v140 = vpack.c.b16 %v113, %v112
  %v141 = vpack.c.b16 %v115, %v114
  %v142 = vpack.c.b16 %v117, %v116
  %v143 = vpack.c.b16 %v119, %v118
  %v144 = vpack.c.b16 %v121, %v120
  %v145 = vpack.c.b16 %v123, %v122
  %v146 = vpack.c.b16 %v125, %v124
  %v147 = vpack.c.b16 %v127, %v126
  %v148 = vpack.c.b16 %v129, %v128
  %v149 = vpack.c.b16 %v131, %v130
  %v150 = vpack.c.b16 %v133, %v132
  %v151 = vpack.c.b16 %v135, %v134
  %v160 = vunpack.c.l.b16 %v60
  %v161 = vunpack.c.l.b16 %v61
  %v162 = vunpack.c.l.b16 %v62
  %v163 = vunpack.c.l.b16 %v63
  %v164 = vunpack.c.l.b16 %v64
  %v165 = vunpack.c.l.b16 %v65
  %v166 = vunpack.c.l.b16 %v66
  %v167 = vunpack.c.l.b16 %v67
  %v168 = vpack.c.b16 %v161, %v160
  %v169 = vpack.c.b16 %v163, %v162
  %v170 = vpack.c.b16 %v165, %v164
  %v171 = vpack.c.b16 %v167, %v166
  %vm176 = vcmask 523264
  %v178 = vsel %vm176, %v136, 0
  %v181 = vsel %vm176, %v137, 0
  %v184 = vsel %vm176, %v138, 0
  %v187 = vsel %vm176, %v139, 0
  %v190 = vsel %vm176, %v140, 0
  %v193 = vsel %vm176, %v141, 0
  %v196 = vsel %vm176, %v142, 0
  %v199 = vsel %vm176, %v143, 0
  %v202 = vsel %vm176, %v144, 0
  %v205 = vsel %vm176, %v145, 0
  %v208 = vsel %vm176, %v146, 0
  %v211 = vsel %vm176, %v147, 0
  %v214 = vsel %vm176, %v148, 0
  %v217 = vsel %vm176, %v149, 0
  %v220 = vsel %vm176, %v150, 0
  %v223 = vsel %vm176, %v151, 0
  %225 = vmatprep.subr.bf16.mxu0 0
  %226 = vmatpush1.bf16.msra.mxu0 %v168
  %227 = vmatprep.subr.bf16.mxu0 0
  %228 = vmatpush1.bf16.msra.mxu0 %v169
  %229 = vmatprep.subr.bf16.mxu0 0
  %230 = vmatpush1.bf16.msra.mxu0 %v170
  %231 = vmatprep.subr.bf16.mxu0 0
  %232 = vmatpush1.bf16.msra.mxu0 %v171
  %233 = vmatprep.subr.bf16.mxu0 0
  %234 = vmatpush1.bf16.msra.mxu0 0
  %235 = vmatprep.subr.bf16.mxu0 0
  %236 = vmatpush1.bf16.msra.mxu0 0
  %237 = vmatprep.subr.bf16.mxu0 0
  %238 = vmatpush1.bf16.msra.mxu0 0
  %239 = vmatprep.subr.bf16.mxu0 0
  %240 = vmatpush1.bf16.msra.mxu0 0
  %241 = vmatprep.subr.bf16.mxu0 0
  %242 = vmatpush1.bf16.msra.mxu0 0
  %243 = vmatprep.subr.bf16.mxu0 0
  %244 = vmatpush1.bf16.msra.mxu0 0
  %245 = vmatprep.subr.bf16.mxu0 0
  %246 = vmatpush1.bf16.msra.mxu0 0
  %247 = vmatprep.subr.bf16.mxu0 0
  %248 = vmatpush1.bf16.msra.mxu0 0
  %249 = vmatprep.subr.bf16.mxu0 0
  %250 = vmatpush1.bf16.msra.mxu0 0
  %251 = vmatprep.subr.bf16.mxu0 0
  %252 = vmatpush1.bf16.msra.mxu0 0
  %253 = vmatprep.subr.bf16.mxu0 0
  %254 = vmatpush1.bf16.msra.mxu0 0
  %255 = vmatprep.subr.bf16.mxu0 0
  %256 = vmatpush1.bf16.msra.mxu0 0
  %257 = vmatprep.mubr.bf16.mxu0 0
  %258 = vmatmul.mubr.bf16.gmra.mrb[0].mxu0 %v178
  %v259 = vpop.f32.mrb[0].mxu0
  %v260 = vadd.f32 %v71, %v259
  %v261 = vpop.f32.mrb[0].mxu0
  %v262 = vpop.f32.mrb[0].mxu0
  %v263 = vadd.f32 %v71, %v262
  %v264 = vpop.f32.mrb[0].mxu0
  %265 = vmatprep.mubr.bf16.mxu0 0
  %266 = vmatmul.mubr.bf16.gmra.mrb[0].mxu0 %v181
  %v267 = vpop.f32.mrb[0].mxu0
  %v268 = vadd.f32 %v71, %v267
  %v269 = vpop.f32.mrb[0].mxu0
  %v270 = vpop.f32.mrb[0].mxu0
  %v271 = vadd.f32 %v71, %v270
  %v272 = vpop.f32.mrb[0].mxu0
  %273 = vmatprep.mubr.bf16.mxu0 0
  %274 = vmatmul.mubr.bf16.gmra.mrb[0].mxu0 %v184
  %v275 = vpop.f32.mrb[0].mxu0
  %v276 = vadd.f32 %v71, %v275
  %v277 = vpop.f32.mrb[0].mxu0
  %v278 = vpop.f32.mrb[0].mxu0
  %v279 = vadd.f32 %v71, %v278
  %v280 = vpop.f32.mrb[0].mxu0
  %281 = vmatprep.mubr.bf16.mxu0 0
  %282 = vmatmul.mubr.bf16.gmra.mrb[0].mxu0 %v187
  %v283 = vpop.f32.mrb[0].mxu0
  %v284 = vadd.f32 %v71, %v283
  %v285 = vpop.f32.mrb[0].mxu0
  %v286 = vpop.f32.mrb[0].mxu0
  %v287 = vadd.f32 %v71, %v286
  %v288 = vpop.f32.mrb[0].mxu0
  %289 = vmatprep.mubr.bf16.mxu0 0
  %290 = vmatmul.mubr.bf16.gmra.mrb[0].mxu0 %v190
  %v291 = vpop.f32.mrb[0].mxu0
  %v292 = vadd.f32 %v71, %v291
  %v293 = vpop.f32.mrb[0].mxu0
  %v294 = vpop.f32.mrb[0].mxu0
  %v295 = vadd.f32 %v71, %v294
  %v296 = vpop.f32.mrb[0].mxu0
  %297 = vmatprep.mubr.bf16.mxu0 0
  %298 = vmatmul.mubr.bf16.gmra.mrb[0].mxu0 %v193
  %v299 = vpop.f32.mrb[0].mxu0
  %v300 = vadd.f32 %v71, %v299
  %v301 = vpop.f32.mrb[0].mxu0
  %v302 = vpop.f32.mrb[0].mxu0
  %v303 = vadd.f32 %v71, %v302
  %v304 = vpop.f32.mrb[0].mxu0
  %305 = vmatprep.mubr.bf16.mxu0 0
  %306 = vmatmul.mubr.bf16.gmra.mrb[0].mxu0 %v196
  %v307 = vpop.f32.mrb[0].mxu0
  %v308 = vadd.f32 %v71, %v307
  %v309 = vpop.f32.mrb[0].mxu0
  %v310 = vpop.f32.mrb[0].mxu0
  %v311 = vadd.f32 %v71, %v310
  %v312 = vpop.f32.mrb[0].mxu0
  %313 = vmatprep.mubr.bf16.mxu0 0
  %314 = vmatmul.mubr.bf16.gmra.mrb[0].mxu0 %v199
  %v315 = vpop.f32.mrb[0].mxu0
  %v316 = vadd.f32 %v71, %v315
  %v317 = vpop.f32.mrb[0].mxu0
  %v318 = vpop.f32.mrb[0].mxu0
  %v319 = vadd.f32 %v71, %v318
  %v320 = vpop.f32.mrb[0].mxu0
  %321 = vmatprep.mubr.bf16.mxu0 0
  %322 = vmatmul.mubr.bf16.gmra.mrb[0].mxu0 %v202
  %v323 = vpop.f32.mrb[0].mxu0
  %v324 = vadd.f32 %v71, %v323
  %v325 = vpop.f32.mrb[0].mxu0
  %v326 = vpop.f32.mrb[0].mxu0
  %v327 = vadd.f32 %v71, %v326
  %v328 = vpop.f32.mrb[0].mxu0
  %329 = vmatprep.mubr.bf16.mxu0 0
  %330 = vmatmul.mubr.bf16.gmra.mrb[0].mxu0 %v205
  %v331 = vpop.f32.mrb[0].mxu0
  %v332 = vadd.f32 %v71, %v331
  %v333 = vpop.f32.mrb[0].mxu0
  %v334 = vpop.f32.mrb[0].mxu0
  %v335 = vadd.f32 %v71, %v334
  %v336 = vpop.f32.mrb[0].mxu0
  %337 = vmatprep.mubr.bf16.mxu0 0
  %338 = vmatmul.mubr.bf16.gmra.mrb[0].mxu0 %v208
  %v339 = vpop.f32.mrb[0].mxu0
  %v340 = vadd.f32 %v71, %v339
  %v341 = vpop.f32.mrb[0].mxu0
  %v342 = vpop.f32.mrb[0].mxu0
  %v343 = vadd.f32 %v71, %v342
  %v344 = vpop.f32.mrb[0].mxu0
  %345 = vmatprep.mubr.bf16.mxu0 0
  %346 = vmatmul.mubr.bf16.gmra.mrb[0].mxu0 %v211
  %v347 = vpop.f32.mrb[0].mxu0
  %v348 = vadd.f32 %v71, %v347
  %v349 = vpop.f32.mrb[0].mxu0
  %v350 = vpop.f32.mrb[0].mxu0
  %v351 = vadd.f32 %v71, %v350
  %v352 = vpop.f32.mrb[0].mxu0
  %353 = vmatprep.mubr.bf16.mxu0 0
  %354 = vmatmul.mubr.bf16.gmra.mrb[0].mxu0 %v214
  %v355 = vpop.f32.mrb[0].mxu0
  %v356 = vadd.f32 %v71, %v355
  %v357 = vpop.f32.mrb[0].mxu0
  %v358 = vpop.f32.mrb[0].mxu0
  %v359 = vadd.f32 %v71, %v358
  %v360 = vpop.f32.mrb[0].mxu0
  %361 = vmatprep.mubr.bf16.mxu0 0
  %362 = vmatmul.mubr.bf16.gmra.mrb[0].mxu0 %v217
  %v363 = vpop.f32.mrb[0].mxu0
  %v364 = vadd.f32 %v71, %v363
  %v365 = vpop.f32.mrb[0].mxu0
  %v366 = vpop.f32.mrb[0].mxu0
  %v367 = vadd.f32 %v71, %v366
  %v368 = vpop.f32.mrb[0].mxu0
  %369 = vmatprep.mubr.bf16.mxu0 0
  %370 = vmatmul.mubr.bf16.gmra.mrb[0].mxu0 %v220
  %v371 = vpop.f32.mrb[0].mxu0
  %v372 = vadd.f32 %v71, %v371
  %v373 = vpop.f32.mrb[0].mxu0
  %v374 = vpop.f32.mrb[0].mxu0
  %v375 = vadd.f32 %v71, %v374
  %v376 = vpop.f32.mrb[0].mxu0
  %377 = vmatprep.mubr.bf16.mxu0 0
  %378 = vmatmul.mubr.bf16.gmra.mrb[0].mxu0 %v223
  %v379 = vpop.f32.mrb[0].mxu0
  %v380 = vadd.f32 %v71, %v379
  %v381 = vpop.f32.mrb[0].mxu0
  %v382 = vpop.f32.mrb[0].mxu0
  %v383 = vadd.f32 %v71, %v382
  %v384 = vpop.f32.mrb[0].mxu0
  %385 = vdwg.mxu0
  %v386 = vsel %vm176, %v260, 0.0
  %387 = vadd.xlane.f32.xlu0 %v386
  %v388 = vpop.xlane.xlu0 %387
  %v389 = vsel %vm176, %v263, 0.0
  %390 = vadd.xlane.f32.xlu0 %v389
  %v391 = vpop.xlane.xlu0 %390
  %v392 = vsel %vm176, %v268, 0.0
  %393 = vadd.xlane.f32.xlu0 %v392
  %v394 = vpop.xlane.xlu0 %393
  %v395 = vsel %vm176, %v271, 0.0
  %396 = vadd.xlane.f32.xlu0 %v395
  %v397 = vpop.xlane.xlu0 %396
  %v398 = vsel %vm176, %v276, 0.0
  %399 = vadd.xlane.f32.xlu0 %v398
  %v400 = vpop.xlane.xlu0 %399
  %v401 = vsel %vm176, %v279, 0.0
  %402 = vadd.xlane.f32.xlu0 %v401
  %v403 = vpop.xlane.xlu0 %402
  %v404 = vsel %vm176, %v284, 0.0
  %405 = vadd.xlane.f32.xlu0 %v404
  %v406 = vpop.xlane.xlu0 %405
  %v407 = vsel %vm176, %v287, 0.0
  %408 = vadd.xlane.f32.xlu0 %v407
  %v409 = vpop.xlane.xlu0 %408
  %v410 = vsel %vm176, %v292, 0.0
  %411 = vadd.xlane.f32.xlu0 %v410
  %v412 = vpop.xlane.xlu0 %411
  %v413 = vsel %vm176, %v295, 0.0
  %414 = vadd.xlane.f32.xlu0 %v413
  %v415 = vpop.xlane.xlu0 %414
  %v416 = vsel %vm176, %v300, 0.0
  %417 = vadd.xlane.f32.xlu0 %v416
  %v418 = vpop.xlane.xlu0 %417
  %v419 = vsel %vm176, %v303, 0.0
  %420 = vadd.xlane.f32.xlu0 %v419
  %v421 = vpop.xlane.xlu0 %420
  %v422 = vsel %vm176, %v308, 0.0
  %423 = vadd.xlane.f32.xlu0 %v422
  %v424 = vpop.xlane.xlu0 %423
  %v425 = vsel %vm176, %v311, 0.0
  %426 = vadd.xlane.f32.xlu0 %v425
  %v427 = vpop.xlane.xlu0 %426
  %v428 = vsel %vm176, %v316, 0.0
  %429 = vadd.xlane.f32.xlu0 %v428
  %v430 = vpop.xlane.xlu0 %429
  %v431 = vsel %vm176, %v319, 0.0
  %432 = vadd.xlane.f32.xlu0 %v431
  %v433 = vpop.xlane.xlu0 %432
  %v434 = vsel %vm176, %v324, 0.0
  %435 = vadd.xlane.f32.xlu0 %v434
  %v436 = vpop.xlane.xlu0 %435
  %v437 = vsel %vm176, %v327, 0.0
  %438 = vadd.xlane.f32.xlu0 %v437
  %v439 = vpop.xlane.xlu0 %438
  %v440 = vsel %vm176, %v332, 0.0
  %441 = vadd.xlane.f32.xlu0 %v440
  %v442 = vpop.xlane.xlu0 %441
  %v443 = vsel %vm176, %v335, 0.0
  %444 = vadd.xlane.f32.xlu0 %v443
  %v445 = vpop.xlane.xlu0 %444
  %v446 = vsel %vm176, %v340, 0.0
  %447 = vadd.xlane.f32.xlu0 %v446
  %v448 = vpop.xlane.xlu0 %447
  %v449 = vsel %vm176, %v343, 0.0
  %450 = vadd.xlane.f32.xlu0 %v449
  %v451 = vpop.xlane.xlu0 %450
  %v452 = vsel %vm176, %v348, 0.0
  %453 = vadd.xlane.f32.xlu0 %v452
  %v454 = vpop.xlane.xlu0 %453
  %v455 = vsel %vm176, %v351, 0.0
  %456 = vadd.xlane.f32.xlu0 %v455
  %v457 = vpop.xlane.xlu0 %456
  %v458 = vsel %vm176, %v356, 0.0
  %459 = vadd.xlane.f32.xlu0 %v458
  %v460 = vpop.xlane.xlu0 %459
  %v461 = vsel %vm176, %v359, 0.0
  %462 = vadd.xlane.f32.xlu0 %v461
  %v463 = vpop.xlane.xlu0 %462
  %v464 = vsel %vm176, %v364, 0.0
  %465 = vadd.xlane.f32.xlu0 %v464
  %v466 = vpop.xlane.xlu0 %465
  %v467 = vsel %vm176, %v367, 0.0
  %468 = vadd.xlane.f32.xlu0 %v467
  %v469 = vpop.xlane.xlu0 %468
  %v470 = vsel %vm176, %v372, 0.0
  %471 = vadd.xlane.f32.xlu0 %v470
  %v472 = vpop.xlane.xlu0 %471
  %v473 = vsel %vm176, %v375, 0.0
  %474 = vadd.xlane.f32.xlu0 %v473
  %v475 = vpop.xlane.xlu0 %474
  %v476 = vsel %vm176, %v380, 0.0
  %477 = vadd.xlane.f32.xlu0 %v476
  %v478 = vpop.xlane.xlu0 %477
  %v479 = vsel %vm176, %v383, 0.0
  %480 = vadd.xlane.f32.xlu0 %v479
  %v481 = vpop.xlane.xlu0 %480
  %v482 = vrcp.pop 64.0
  %v483 = vmul.f32 %v388, %v482
  %v484 = vmul.f32 %v391, %v482
  %v485 = vmul.f32 %v394, %v482
  %v486 = vmul.f32 %v397, %v482
  %v487 = vmul.f32 %v400, %v482
  %v488 = vmul.f32 %v403, %v482
  %v489 = vmul.f32 %v406, %v482
  %v490 = vmul.f32 %v409, %v482
  %v491 = vmul.f32 %v412, %v482
  %v492 = vmul.f32 %v415, %v482
  %v493 = vmul.f32 %v418, %v482
  %v494 = vmul.f32 %v421, %v482
  %v495 = vmul.f32 %v424, %v482
  %v496 = vmul.f32 %v427, %v482
  %v497 = vmul.f32 %v430, %v482
  %v498 = vmul.f32 %v433, %v482
  %v499 = vmul.f32 %v436, %v482
  %v500 = vmul.f32 %v439, %v482
  %v501 = vmul.f32 %v442, %v482
  %v502 = vmul.f32 %v445, %v482
  %v503 = vmul.f32 %v448, %v482
  %v504 = vmul.f32 %v451, %v482
  %v505 = vmul.f32 %v454, %v482
  %v506 = vmul.f32 %v457, %v482
  %v507 = vmul.f32 %v460, %v482
  %v508 = vmul.f32 %v463, %v482
  %v509 = vmul.f32 %v466, %v482
  %v510 = vmul.f32 %v469, %v482
  %v511 = vmul.f32 %v472, %v482
  %v512 = vmul.f32 %v475, %v482
  %v513 = vmul.f32 %v478, %v482
  %v514 = vmul.f32 %v481, %v482
  %v515 = vmul.f32 %v260, %v260
  %v516 = vmul.f32 %v263, %v263
  %v517 = vmul.f32 %v268, %v268
  %v518 = vmul.f32 %v271, %v271
  %v519 = vmul.f32 %v276, %v276
  %v520 = vmul.f32 %v279, %v279
  %v521 = vmul.f32 %v284, %v284
  %v522 = vmul.f32 %v287, %v287
  %v523 = vmul.f32 %v292, %v292
  %v524 = vmul.f32 %v295, %v295
  %v525 = vmul.f32 %v300, %v300
  %v526 = vmul.f32 %v303, %v303
  %v527 = vmul.f32 %v308, %v308
  %v528 = vmul.f32 %v311, %v311
  %v529 = vmul.f32 %v316, %v316
  %v530 = vmul.f32 %v319, %v319
  %v531 = vmul.f32 %v324, %v324
  %v532 = vmul.f32 %v327, %v327
  %v533 = vmul.f32 %v332, %v332
  %v534 = vmul.f32 %v335, %v335
  %v535 = vmul.f32 %v340, %v340
  %v536 = vmul.f32 %v343, %v343
  %v537 = vmul.f32 %v348, %v348
  %v538 = vmul.f32 %v351, %v351
  %v539 = vmul.f32 %v356, %v356
  %v540 = vmul.f32 %v359, %v359
  %v541 = vmul.f32 %v364, %v364
  %v542 = vmul.f32 %v367, %v367
  %v543 = vmul.f32 %v372, %v372
  %v544 = vmul.f32 %v375, %v375
  %v545 = vmul.f32 %v380, %v380
  %v546 = vmul.f32 %v383, %v383
  %v547 = vsel %vm176, %v515, 0.0
  %548 = vadd.xlane.f32.xlu0 %v547
  %v549 = vpop.xlane.xlu0 %548
  %v550 = vsel %vm176, %v516, 0.0
  %551 = vadd.xlane.f32.xlu0 %v550
  %v552 = vpop.xlane.xlu0 %551
  %v553 = vsel %vm176, %v517, 0.0
  %554 = vadd.xlane.f32.xlu0 %v553
  %v555 = vpop.xlane.xlu0 %554
  %v556 = vsel %vm176, %v518, 0.0
  %557 = vadd.xlane.f32.xlu0 %v556
  %v558 = vpop.xlane.xlu0 %557
  %v559 = vsel %vm176, %v519, 0.0
  %560 = vadd.xlane.f32.xlu0 %v559
  %v561 = vpop.xlane.xlu0 %560
  %v562 = vsel %vm176, %v520, 0.0
  %563 = vadd.xlane.f32.xlu0 %v562
  %v564 = vpop.xlane.xlu0 %563
  %v565 = vsel %vm176, %v521, 0.0
  %566 = vadd.xlane.f32.xlu0 %v565
  %v567 = vpop.xlane.xlu0 %566
  %v568 = vsel %vm176, %v522, 0.0
  %569 = vadd.xlane.f32.xlu0 %v568
  %v570 = vpop.xlane.xlu0 %569
  %v571 = vsel %vm176, %v523, 0.0
  %572 = vadd.xlane.f32.xlu0 %v571
  %v573 = vpop.xlane.xlu0 %572
  %v574 = vsel %vm176, %v524, 0.0
  %575 = vadd.xlane.f32.xlu0 %v574
  %v576 = vpop.xlane.xlu0 %575
  %v577 = vsel %vm176, %v525, 0.0
  %578 = vadd.xlane.f32.xlu0 %v577
  %v579 = vpop.xlane.xlu0 %578
  %v580 = vsel %vm176, %v526, 0.0
  %581 = vadd.xlane.f32.xlu0 %v580
  %v582 = vpop.xlane.xlu0 %581
  %v583 = vsel %vm176, %v527, 0.0
  %584 = vadd.xlane.f32.xlu0 %v583
  %v585 = vpop.xlane.xlu0 %584
  %v586 = vsel %vm176, %v528, 0.0
  %587 = vadd.xlane.f32.xlu0 %v586
  %v588 = vpop.xlane.xlu0 %587
  %v589 = vsel %vm176, %v529, 0.0
  %590 = vadd.xlane.f32.xlu0 %v589
  %v591 = vpop.xlane.xlu0 %590
  %v592 = vsel %vm176, %v530, 0.0
  %593 = vadd.xlane.f32.xlu0 %v592
  %v594 = vpop.xlane.xlu0 %593
  %v595 = vsel %vm176, %v531, 0.0
  %596 = vadd.xlane.f32.xlu0 %v595
  %v597 = vpop.xlane.xlu0 %596
  %v598 = vsel %vm176, %v532, 0.0
  %599 = vadd.xlane.f32.xlu0 %v598
  %v600 = vpop.xlane.xlu0 %599
  %v601 = vsel %vm176, %v533, 0.0
  %602 = vadd.xlane.f32.xlu0 %v601
  %v603 = vpop.xlane.xlu0 %602
  %v604 = vsel %vm176, %v534, 0.0
  %605 = vadd.xlane.f32.xlu0 %v604
  %v606 = vpop.xlane.xlu0 %605
  %v607 = vsel %vm176, %v535, 0.0
  %608 = vadd.xlane.f32.xlu0 %v607
  %v609 = vpop.xlane.xlu0 %608
  %v610 = vsel %vm176, %v536, 0.0
  %611 = vadd.xlane.f32.xlu0 %v610
  %v612 = vpop.xlane.xlu0 %611
  %v613 = vsel %vm176, %v537, 0.0
  %614 = vadd.xlane.f32.xlu0 %v613
  %v615 = vpop.xlane.xlu0 %614
  %v616 = vsel %vm176, %v538, 0.0
  %617 = vadd.xlane.f32.xlu0 %v616
  %v618 = vpop.xlane.xlu0 %617
  %v619 = vsel %vm176, %v539, 0.0
  %620 = vadd.xlane.f32.xlu0 %v619
  %v621 = vpop.xlane.xlu0 %620
  %v622 = vsel %vm176, %v540, 0.0
  %623 = vadd.xlane.f32.xlu0 %v622
  %v624 = vpop.xlane.xlu0 %623
  %v625 = vsel %vm176, %v541, 0.0
  %626 = vadd.xlane.f32.xlu0 %v625
  %v627 = vpop.xlane.xlu0 %626
  %v628 = vsel %vm176, %v542, 0.0
  %629 = vadd.xlane.f32.xlu0 %v628
  %v630 = vpop.xlane.xlu0 %629
  %v631 = vsel %vm176, %v543, 0.0
  %632 = vadd.xlane.f32.xlu0 %v631
  %v633 = vpop.xlane.xlu0 %632
  %v634 = vsel %vm176, %v544, 0.0
  %635 = vadd.xlane.f32.xlu0 %v634
  %v636 = vpop.xlane.xlu0 %635
  %v637 = vsel %vm176, %v545, 0.0
  %638 = vadd.xlane.f32.xlu0 %v637
  %v639 = vpop.xlane.xlu0 %638
  %v640 = vsel %vm176, %v546, 0.0
  %641 = vadd.xlane.f32.xlu0 %v640
  %v642 = vpop.xlane.xlu0 %641
  %v643 = vmul.f32 %v549, %v482
  %v644 = vmul.f32 %v552, %v482
  %v645 = vmul.f32 %v555, %v482
  %v646 = vmul.f32 %v558, %v482
  %v647 = vmul.f32 %v561, %v482
  %v648 = vmul.f32 %v564, %v482
  %v649 = vmul.f32 %v567, %v482
  %v650 = vmul.f32 %v570, %v482
  %v651 = vmul.f32 %v573, %v482
  %v652 = vmul.f32 %v576, %v482
  %v653 = vmul.f32 %v579, %v482
  %v654 = vmul.f32 %v582, %v482
  %v655 = vmul.f32 %v585, %v482
  %v656 = vmul.f32 %v588, %v482
  %v657 = vmul.f32 %v591, %v482
  %v658 = vmul.f32 %v594, %v482
  %v659 = vmul.f32 %v597, %v482
  %v660 = vmul.f32 %v600, %v482
  %v661 = vmul.f32 %v603, %v482
  %v662 = vmul.f32 %v606, %v482
  %v663 = vmul.f32 %v609, %v482
  %v664 = vmul.f32 %v612, %v482
  %v665 = vmul.f32 %v615, %v482
  %v666 = vmul.f32 %v618, %v482
  %v667 = vmul.f32 %v621, %v482
  %v668 = vmul.f32 %v624, %v482
  %v669 = vmul.f32 %v627, %v482
  %v670 = vmul.f32 %v630, %v482
  %v671 = vmul.f32 %v633, %v482
  %v672 = vmul.f32 %v636, %v482
  %v673 = vmul.f32 %v639, %v482
  %v674 = vmul.f32 %v642, %v482
  %v675 = vmul.f32 %v483, %v483
  %v676 = vmul.f32 %v484, %v484
  %v677 = vmul.f32 %v485, %v485
  %v678 = vmul.f32 %v486, %v486
  %v679 = vmul.f32 %v487, %v487
  %v680 = vmul.f32 %v488, %v488
  %v681 = vmul.f32 %v489, %v489
  %v682 = vmul.f32 %v490, %v490
  %v683 = vmul.f32 %v491, %v491
  %v684 = vmul.f32 %v492, %v492
  %v685 = vmul.f32 %v493, %v493
  %v686 = vmul.f32 %v494, %v494
  %v687 = vmul.f32 %v495, %v495
  %v688 = vmul.f32 %v496, %v496
  %v689 = vmul.f32 %v497, %v497
  %v690 = vmul.f32 %v498, %v498
  %v691 = vmul.f32 %v499, %v499
  %v692 = vmul.f32 %v500, %v500
  %v693 = vmul.f32 %v501, %v501
  %v694 = vmul.f32 %v502, %v502
  %v695 = vmul.f32 %v503, %v503
  %v696 = vmul.f32 %v504, %v504
  %v697 = vmul.f32 %v505, %v505
  %v698 = vmul.f32 %v506, %v506
  %v699 = vmul.f32 %v507, %v507
  %v700 = vmul.f32 %v508, %v508
  %v701 = vmul.f32 %v509, %v509
  %v702 = vmul.f32 %v510, %v510
  %v703 = vmul.f32 %v511, %v511
  %v704 = vmul.f32 %v512, %v512
  %v705 = vmul.f32 %v513, %v513
  %v706 = vmul.f32 %v514, %v514
  %v707 = vsub.f32 %v643, %v675
  %v708 = vsub.f32 %v644, %v676
  %v709 = vsub.f32 %v645, %v677
  %v710 = vsub.f32 %v646, %v678
  %v711 = vsub.f32 %v647, %v679
  %v712 = vsub.f32 %v648, %v680
  %v713 = vsub.f32 %v649, %v681
  %v714 = vsub.f32 %v650, %v682
  %v715 = vsub.f32 %v651, %v683
  %v716 = vsub.f32 %v652, %v684
  %v717 = vsub.f32 %v653, %v685
  %v718 = vsub.f32 %v654, %v686
  %v719 = vsub.f32 %v655, %v687
  %v720 = vsub.f32 %v656, %v688
  %v721 = vsub.f32 %v657, %v689
  %v722 = vsub.f32 %v658, %v690
  %v723 = vsub.f32 %v659, %v691
  %v724 = vsub.f32 %v660, %v692
  %v725 = vsub.f32 %v661, %v693
  %v726 = vsub.f32 %v662, %v694
  %v727 = vsub.f32 %v663, %v695
  %v728 = vsub.f32 %v664, %v696
  %v729 = vsub.f32 %v665, %v697
  %v730 = vsub.f32 %v666, %v698
  %v731 = vsub.f32 %v667, %v699
  %v732 = vsub.f32 %v668, %v700
  %v733 = vsub.f32 %v669, %v701
  %v734 = vsub.f32 %v670, %v702
  %v735 = vsub.f32 %v671, %v703
  %v736 = vsub.f32 %v672, %v704
  %v737 = vsub.f32 %v673, %v705
  %v738 = vsub.f32 %v674, %v706
  %v739 = vmax.f32 %v707, 0.0
  %v740 = vmax.f32 %v708, 0.0
  %v741 = vmax.f32 %v709, 0.0
  %v742 = vmax.f32 %v710, 0.0
  %v743 = vmax.f32 %v711, 0.0
  %v744 = vmax.f32 %v712, 0.0
  %v745 = vmax.f32 %v713, 0.0
  %v746 = vmax.f32 %v714, 0.0
  %v747 = vmax.f32 %v715, 0.0
  %v748 = vmax.f32 %v716, 0.0
  %v749 = vmax.f32 %v717, 0.0
  %v750 = vmax.f32 %v718, 0.0
  %v751 = vmax.f32 %v719, 0.0
  %v752 = vmax.f32 %v720, 0.0
  %v753 = vmax.f32 %v721, 0.0
  %v754 = vmax.f32 %v722, 0.0
  %v755 = vmax.f32 %v723, 0.0
  %v756 = vmax.f32 %v724, 0.0
  %v757 = vmax.f32 %v725, 0.0
  %v758 = vmax.f32 %v726, 0.0
  %v759 = vmax.f32 %v727, 0.0
  %v760 = vmax.f32 %v728, 0.0
  %v761 = vmax.f32 %v729, 0.0
  %v762 = vmax.f32 %v730, 0.0
  %v763 = vmax.f32 %v731, 0.0
  %v764 = vmax.f32 %v732, 0.0
  %v765 = vmax.f32 %v733, 0.0
  %v766 = vmax.f32 %v734, 0.0
  %v767 = vmax.f32 %v735, 0.0
  %v768 = vmax.f32 %v736, 0.0
  %v769 = vmax.f32 %v737, 0.0
  %v770 = vmax.f32 %v738, 0.0
  %v771 = vsub.f32 %v260, %v483
  %v772 = vsub.f32 %v263, %v484
  %v773 = vsub.f32 %v268, %v485
  %v774 = vsub.f32 %v271, %v486
  %v775 = vsub.f32 %v276, %v487
  %v776 = vsub.f32 %v279, %v488
  %v777 = vsub.f32 %v284, %v489
  %v778 = vsub.f32 %v287, %v490
  %v779 = vsub.f32 %v292, %v491
  %v780 = vsub.f32 %v295, %v492
  %v781 = vsub.f32 %v300, %v493
  %v782 = vsub.f32 %v303, %v494
  %v783 = vsub.f32 %v308, %v495
  %v784 = vsub.f32 %v311, %v496
  %v785 = vsub.f32 %v316, %v497
  %v786 = vsub.f32 %v319, %v498
  %v787 = vsub.f32 %v324, %v499
  %v788 = vsub.f32 %v327, %v500
  %v789 = vsub.f32 %v332, %v501
  %v790 = vsub.f32 %v335, %v502
  %v791 = vsub.f32 %v340, %v503
  %v792 = vsub.f32 %v343, %v504
  %v793 = vsub.f32 %v348, %v505
  %v794 = vsub.f32 %v351, %v506
  %v795 = vsub.f32 %v356, %v507
  %v796 = vsub.f32 %v359, %v508
  %v797 = vsub.f32 %v364, %v509
  %v798 = vsub.f32 %v367, %v510
  %v799 = vsub.f32 %v372, %v511
  %v800 = vsub.f32 %v375, %v512
  %v801 = vsub.f32 %v380, %v513
  %v802 = vsub.f32 %v383, %v514
  %v803 = vadd.f32 %v739, 1e-05
  %v804 = vadd.f32 %v740, 1e-05
  %v805 = vadd.f32 %v741, 1e-05
  %v806 = vadd.f32 %v742, 1e-05
  %v807 = vadd.f32 %v743, 1e-05
  %v808 = vadd.f32 %v744, 1e-05
  %v809 = vadd.f32 %v745, 1e-05
  %v810 = vadd.f32 %v746, 1e-05
  %v811 = vadd.f32 %v747, 1e-05
  %v812 = vadd.f32 %v748, 1e-05
  %v813 = vadd.f32 %v749, 1e-05
  %v814 = vadd.f32 %v750, 1e-05
  %v815 = vadd.f32 %v751, 1e-05
  %v816 = vadd.f32 %v752, 1e-05
  %v817 = vadd.f32 %v753, 1e-05
  %v818 = vadd.f32 %v754, 1e-05
  %v819 = vadd.f32 %v755, 1e-05
  %v820 = vadd.f32 %v756, 1e-05
  %v821 = vadd.f32 %v757, 1e-05
  %v822 = vadd.f32 %v758, 1e-05
  %v823 = vadd.f32 %v759, 1e-05
  %v824 = vadd.f32 %v760, 1e-05
  %v825 = vadd.f32 %v761, 1e-05
  %v826 = vadd.f32 %v762, 1e-05
  %v827 = vadd.f32 %v763, 1e-05
  %v828 = vadd.f32 %v764, 1e-05
  %v829 = vadd.f32 %v765, 1e-05
  %v830 = vadd.f32 %v766, 1e-05
  %v831 = vadd.f32 %v767, 1e-05
  %v832 = vadd.f32 %v768, 1e-05
  %v833 = vadd.f32 %v769, 1e-05
  %v834 = vadd.f32 %v770, 1e-05
  %v835 = vrsqrt.pop %v803
  %v836 = vrsqrt.pop %v804
  %v837 = vrsqrt.pop %v805
  %v838 = vrsqrt.pop %v806
  %v839 = vrsqrt.pop %v807
  %v840 = vrsqrt.pop %v808
  %v841 = vrsqrt.pop %v809
  %v842 = vrsqrt.pop %v810
  %v843 = vrsqrt.pop %v811
  %v844 = vrsqrt.pop %v812
  %v845 = vrsqrt.pop %v813
  %v846 = vrsqrt.pop %v814
  %v847 = vrsqrt.pop %v815
  %v848 = vrsqrt.pop %v816
  %v849 = vrsqrt.pop %v817
  %v850 = vrsqrt.pop %v818
  %v851 = vrsqrt.pop %v819
  %v852 = vrsqrt.pop %v820
  %v853 = vrsqrt.pop %v821
  %v854 = vrsqrt.pop %v822
  %v855 = vrsqrt.pop %v823
  %v856 = vrsqrt.pop %v824
  %v857 = vrsqrt.pop %v825
  %v858 = vrsqrt.pop %v826
  %v859 = vrsqrt.pop %v827
  %v860 = vrsqrt.pop %v828
  %v861 = vrsqrt.pop %v829
  %v862 = vrsqrt.pop %v830
  %v863 = vrsqrt.pop %v831
  %v864 = vrsqrt.pop %v832
  %v865 = vrsqrt.pop %v833
  %v866 = vrsqrt.pop %v834
  %v867 = vmul.f32 %v771, %v835
  %v868 = vmul.f32 %v772, %v836
  %v869 = vmul.f32 %v773, %v837
  %v870 = vmul.f32 %v774, %v838
  %v871 = vmul.f32 %v775, %v839
  %v872 = vmul.f32 %v776, %v840
  %v873 = vmul.f32 %v777, %v841
  %v874 = vmul.f32 %v778, %v842
  %v875 = vmul.f32 %v779, %v843
  %v876 = vmul.f32 %v780, %v844
  %v877 = vmul.f32 %v781, %v845
  %v878 = vmul.f32 %v782, %v846
  %v879 = vmul.f32 %v783, %v847
  %v880 = vmul.f32 %v784, %v848
  %v881 = vmul.f32 %v785, %v849
  %v882 = vmul.f32 %v786, %v850
  %v883 = vmul.f32 %v787, %v851
  %v884 = vmul.f32 %v788, %v852
  %v885 = vmul.f32 %v789, %v853
  %v886 = vmul.f32 %v790, %v854
  %v887 = vmul.f32 %v791, %v855
  %v888 = vmul.f32 %v792, %v856
  %v889 = vmul.f32 %v793, %v857
  %v890 = vmul.f32 %v794, %v858
  %v891 = vmul.f32 %v795, %v859
  %v892 = vmul.f32 %v796, %v860
  %v893 = vmul.f32 %v797, %v861
  %v894 = vmul.f32 %v798, %v862
  %v895 = vmul.f32 %v799, %v863
  %v896 = vmul.f32 %v800, %v864
  %v897 = vmul.f32 %v801, %v865
  %v898 = vmul.f32 %v802, %v866
  %v899 = vlaneseq
  %v900 = vshrl.u32 %v899, 7
  %v901 = vsub.s32 0, %v900
  %v902 = vrot.slane %v54, %v901
  %v903 = vmul.f32 %v867, %v902
  %v904 = vmul.f32 %v868, %v902
  %v905 = vmul.f32 %v869, %v902
  %v906 = vmul.f32 %v870, %v902
  %v907 = vmul.f32 %v871, %v902
  %v908 = vmul.f32 %v872, %v902
  %v909 = vmul.f32 %v873, %v902
  %v910 = vmul.f32 %v874, %v902
  %v911 = vmul.f32 %v875, %v902
  %v912 = vmul.f32 %v876, %v902
  %v913 = vmul.f32 %v877, %v902
  %v914 = vmul.f32 %v878, %v902
  %v915 = vmul.f32 %v879, %v902
  %v916 = vmul.f32 %v880, %v902
  %v917 = vmul.f32 %v881, %v902
  %v918 = vmul.f32 %v882, %v902
  %v919 = vmul.f32 %v883, %v902
  %v920 = vmul.f32 %v884, %v902
  %v921 = vmul.f32 %v885, %v902
  %v922 = vmul.f32 %v886, %v902
  %v923 = vmul.f32 %v887, %v902
  %v924 = vmul.f32 %v888, %v902
  %v925 = vmul.f32 %v889, %v902
  %v926 = vmul.f32 %v890, %v902
  %v927 = vmul.f32 %v891, %v902
  %v928 = vmul.f32 %v892, %v902
  %v929 = vmul.f32 %v893, %v902
  %v930 = vmul.f32 %v894, %v902
  %v931 = vmul.f32 %v895, %v902
  %v932 = vmul.f32 %v896, %v902
  %v933 = vmul.f32 %v897, %v902
  %v934 = vmul.f32 %v898, %v902
  %v935 = vlaneseq
  %v936 = vshrl.u32 %v935, 7
  %v937 = vsub.s32 0, %v936
  %v938 = vrot.slane %v55, %v937
  %v939 = vadd.f32 %v903, %v938
  %v940 = vadd.f32 %v904, %v938
  %v941 = vadd.f32 %v905, %v938
  %v942 = vadd.f32 %v906, %v938
  %v943 = vadd.f32 %v907, %v938
  %v944 = vadd.f32 %v908, %v938
  %v945 = vadd.f32 %v909, %v938
  %v946 = vadd.f32 %v910, %v938
  %v947 = vadd.f32 %v911, %v938
  %v948 = vadd.f32 %v912, %v938
  %v949 = vadd.f32 %v913, %v938
  %v950 = vadd.f32 %v914, %v938
  %v951 = vadd.f32 %v915, %v938
  %v952 = vadd.f32 %v916, %v938
  %v953 = vadd.f32 %v917, %v938
  %v954 = vadd.f32 %v918, %v938
  %v955 = vadd.f32 %v919, %v938
  %v956 = vadd.f32 %v920, %v938
  %v957 = vadd.f32 %v921, %v938
  %v958 = vadd.f32 %v922, %v938
  %v959 = vadd.f32 %v923, %v938
  %v960 = vadd.f32 %v924, %v938
  %v961 = vadd.f32 %v925, %v938
  %v962 = vadd.f32 %v926, %v938
  %v963 = vadd.f32 %v927, %v938
  %v964 = vadd.f32 %v928, %v938
  %v965 = vadd.f32 %v929, %v938
  %v966 = vadd.f32 %v930, %v938
  %v967 = vadd.f32 %v931, %v938
  %v968 = vadd.f32 %v932, %v938
  %v969 = vadd.f32 %v933, %v938
  %v970 = vadd.f32 %v934, %v938
  %v971 = vmax.f32 %v939, 0.0
  %v972 = vmax.f32 %v940, 0.0
  %v973 = vmax.f32 %v941, 0.0
  %v974 = vmax.f32 %v942, 0.0
  %v975 = vmax.f32 %v943, 0.0
  %v976 = vmax.f32 %v944, 0.0
  %v977 = vmax.f32 %v945, 0.0
  %v978 = vmax.f32 %v946, 0.0
  %v979 = vmax.f32 %v947, 0.0
  %v980 = vmax.f32 %v948, 0.0
  %v981 = vmax.f32 %v949, 0.0
  %v982 = vmax.f32 %v950, 0.0
  %v983 = vmax.f32 %v951, 0.0
  %v984 = vmax.f32 %v952, 0.0
  %v985 = vmax.f32 %v953, 0.0
  %v986 = vmax.f32 %v954, 0.0
  %v987 = vmax.f32 %v955, 0.0
  %v988 = vmax.f32 %v956, 0.0
  %v989 = vmax.f32 %v957, 0.0
  %v990 = vmax.f32 %v958, 0.0
  %v991 = vmax.f32 %v959, 0.0
  %v992 = vmax.f32 %v960, 0.0
  %v993 = vmax.f32 %v961, 0.0
  %v994 = vmax.f32 %v962, 0.0
  %v995 = vmax.f32 %v963, 0.0
  %v996 = vmax.f32 %v964, 0.0
  %v997 = vmax.f32 %v965, 0.0
  %v998 = vmax.f32 %v966, 0.0
  %v999 = vmax.f32 %v967, 0.0
  %v1000 = vmax.f32 %v968, 0.0
  %v1001 = vmax.f32 %v969, 0.0
  %v1002 = vmax.f32 %v970, 0.0
  %v1003 = vpack.c.bf16 %v972, %v971
  %v1004 = vpack.c.bf16 %v974, %v973
  %v1005 = vpack.c.bf16 %v976, %v975
  %v1006 = vpack.c.bf16 %v978, %v977
  %v1007 = vpack.c.bf16 %v980, %v979
  %v1008 = vpack.c.bf16 %v982, %v981
  %v1009 = vpack.c.bf16 %v984, %v983
  %v1010 = vpack.c.bf16 %v986, %v985
  %v1011 = vpack.c.bf16 %v988, %v987
  %v1012 = vpack.c.bf16 %v990, %v989
  %v1013 = vpack.c.bf16 %v992, %v991
  %v1014 = vpack.c.bf16 %v994, %v993
  %v1015 = vpack.c.bf16 %v996, %v995
  %v1016 = vpack.c.bf16 %v998, %v997
  %v1017 = vpack.c.bf16 %v1000, %v999
  %v1018 = vpack.c.bf16 %v1002, %v1001
  %v1019 = vld [vmem:[%s2] sm:$0xf]
  %v1020 = vld [vmem:[%s2 + $0x4] sm:$0xf]
  %v1021 = vld [vmem:[%s2 + $0x8] sm:$0xf]
  %v1022 = vld [vmem:[%s2 + $0xc] sm:$0xf]
  %v1023 = vld [vmem:[%s2 + $0x10] sm:$0xf]
  %v1024 = vld [vmem:[%s2 + $0x14] sm:$0xf]
  %v1025 = vld [vmem:[%s2 + $0x18] sm:$0xf]
  %v1026 = vld [vmem:[%s2 + $0x1c] sm:$0xf]
  %v1035 = vunpack.c.l.b16 %v1019
  %v1036 = vunpack.c.l.b16 %v1020
  %v1037 = vunpack.c.l.b16 %v1021
  %v1038 = vunpack.c.l.b16 %v1022
  %v1039 = vunpack.c.l.b16 %v1023
  %v1040 = vunpack.c.l.b16 %v1024
  %v1041 = vunpack.c.l.b16 %v1025
  %v1042 = vunpack.c.l.b16 %v1026
  %v1043 = vpack.c.b16 %v1036, %v1035
  %v1044 = vpack.c.b16 %v1038, %v1037
  %v1045 = vpack.c.b16 %v1040, %v1039
  %v1046 = vpack.c.b16 %v1042, %v1041
  %v1052 = vsel %vm176, %v1003, 0
  %v1055 = vsel %vm176, %v1004, 0
  %v1058 = vsel %vm176, %v1005, 0
  %v1061 = vsel %vm176, %v1006, 0
  %v1064 = vsel %vm176, %v1007, 0
  %v1067 = vsel %vm176, %v1008, 0
  %v1070 = vsel %vm176, %v1009, 0
  %v1073 = vsel %vm176, %v1010, 0
  %v1076 = vsel %vm176, %v1011, 0
  %v1079 = vsel %vm176, %v1012, 0
  %v1082 = vsel %vm176, %v1013, 0
  %v1085 = vsel %vm176, %v1014, 0
  %v1088 = vsel %vm176, %v1015, 0
  %v1091 = vsel %vm176, %v1016, 0
  %v1094 = vsel %vm176, %v1017, 0
  %v1097 = vsel %vm176, %v1018, 0
  %1099 = vmatprep.subr.bf16.mxu0 0
  %1100 = vmatpush1.bf16.msra.mxu0 %v1043
  %1101 = vmatprep.subr.bf16.mxu0 0
  %1102 = vmatpush1.bf16.msra.mxu0 %v1044
  %1103 = vmatprep.subr.bf16.mxu0 0
  %1104 = vmatpush1.bf16.msra.mxu0 %v1045
  %1105 = vmatprep.subr.bf16.mxu0 0
  %1106 = vmatpush1.bf16.msra.mxu0 %v1046
  %1107 = vmatprep.subr.bf16.mxu0 0
  %1108 = vmatpush1.bf16.msra.mxu0 0
  %1109 = vmatprep.subr.bf16.mxu0 0
  %1110 = vmatpush1.bf16.msra.mxu0 0
  %1111 = vmatprep.subr.bf16.mxu0 0
  %1112 = vmatpush1.bf16.msra.mxu0 0
  %1113 = vmatprep.subr.bf16.mxu0 0
  %1114 = vmatpush1.bf16.msra.mxu0 0
  %1115 = vmatprep.subr.bf16.mxu0 0
  %1116 = vmatpush1.bf16.msra.mxu0 0
  %1117 = vmatprep.subr.bf16.mxu0 0
  %1118 = vmatpush1.bf16.msra.mxu0 0
  %1119 = vmatprep.subr.bf16.mxu0 0
  %1120 = vmatpush1.bf16.msra.mxu0 0
  %1121 = vmatprep.subr.bf16.mxu0 0
  %1122 = vmatpush1.bf16.msra.mxu0 0
  %1123 = vmatprep.subr.bf16.mxu0 0
  %1124 = vmatpush1.bf16.msra.mxu0 0
  %1125 = vmatprep.subr.bf16.mxu0 0
  %1126 = vmatpush1.bf16.msra.mxu0 0
  %1127 = vmatprep.subr.bf16.mxu0 0
  %1128 = vmatpush1.bf16.msra.mxu0 0
  %1129 = vmatprep.subr.bf16.mxu0 0
  %1130 = vmatpush1.bf16.msra.mxu0 0
  %1131 = vmatprep.mubr.bf16.mxu0 0
  %1132 = vmatmul.mubr.bf16.gmra.mrb[0].mxu0 %v1052
  %v1133 = vpop.f32.mrb[0].mxu0
  %v1134 = vadd.f32 0.0, %v1133
  %v1135 = vpop.f32.mrb[0].mxu0
  %v1136 = vpop.f32.mrb[0].mxu0
  %v1137 = vadd.f32 0.0, %v1136
  %v1138 = vpop.f32.mrb[0].mxu0
  %1139 = vmatprep.mubr.bf16.mxu0 0
  %1140 = vmatmul.mubr.bf16.gmra.mrb[0].mxu0 %v1055
  %v1141 = vpop.f32.mrb[0].mxu0
  %v1142 = vadd.f32 0.0, %v1141
  %v1143 = vpop.f32.mrb[0].mxu0
  %v1144 = vpop.f32.mrb[0].mxu0
  %v1145 = vadd.f32 0.0, %v1144
  %v1146 = vpop.f32.mrb[0].mxu0
  %1147 = vmatprep.mubr.bf16.mxu0 0
  %1148 = vmatmul.mubr.bf16.gmra.mrb[0].mxu0 %v1058
  %v1149 = vpop.f32.mrb[0].mxu0
  %v1150 = vadd.f32 0.0, %v1149
  %v1151 = vpop.f32.mrb[0].mxu0
  %v1152 = vpop.f32.mrb[0].mxu0
  %v1153 = vadd.f32 0.0, %v1152
  %v1154 = vpop.f32.mrb[0].mxu0
  %1155 = vmatprep.mubr.bf16.mxu0 0
  %1156 = vmatmul.mubr.bf16.gmra.mrb[0].mxu0 %v1061
  %v1157 = vpop.f32.mrb[0].mxu0
  %v1158 = vadd.f32 0.0, %v1157
  %v1159 = vpop.f32.mrb[0].mxu0
  %v1160 = vpop.f32.mrb[0].mxu0
  %v1161 = vadd.f32 0.0, %v1160
  %v1162 = vpop.f32.mrb[0].mxu0
  %1163 = vmatprep.mubr.bf16.mxu0 0
  %1164 = vmatmul.mubr.bf16.gmra.mrb[0].mxu0 %v1064
  %v1165 = vpop.f32.mrb[0].mxu0
  %v1166 = vadd.f32 0.0, %v1165
  %v1167 = vpop.f32.mrb[0].mxu0
  %v1168 = vpop.f32.mrb[0].mxu0
  %v1169 = vadd.f32 0.0, %v1168
  %v1170 = vpop.f32.mrb[0].mxu0
  %1171 = vmatprep.mubr.bf16.mxu0 0
  %1172 = vmatmul.mubr.bf16.gmra.mrb[0].mxu0 %v1067
  %v1173 = vpop.f32.mrb[0].mxu0
  %v1174 = vadd.f32 0.0, %v1173
  %v1175 = vpop.f32.mrb[0].mxu0
  %v1176 = vpop.f32.mrb[0].mxu0
  %v1177 = vadd.f32 0.0, %v1176
  %v1178 = vpop.f32.mrb[0].mxu0
  %1179 = vmatprep.mubr.bf16.mxu0 0
  %1180 = vmatmul.mubr.bf16.gmra.mrb[0].mxu0 %v1070
  %v1181 = vpop.f32.mrb[0].mxu0
  %v1182 = vadd.f32 0.0, %v1181
  %v1183 = vpop.f32.mrb[0].mxu0
  %v1184 = vpop.f32.mrb[0].mxu0
  %v1185 = vadd.f32 0.0, %v1184
  %v1186 = vpop.f32.mrb[0].mxu0
  %1187 = vmatprep.mubr.bf16.mxu0 0
  %1188 = vmatmul.mubr.bf16.gmra.mrb[0].mxu0 %v1073
  %v1189 = vpop.f32.mrb[0].mxu0
  %v1190 = vadd.f32 0.0, %v1189
  %v1191 = vpop.f32.mrb[0].mxu0
  %v1192 = vpop.f32.mrb[0].mxu0
  %v1193 = vadd.f32 0.0, %v1192
  %v1194 = vpop.f32.mrb[0].mxu0
  %1195 = vmatprep.mubr.bf16.mxu0 0
  %1196 = vmatmul.mubr.bf16.gmra.mrb[0].mxu0 %v1076
  %v1197 = vpop.f32.mrb[0].mxu0
  %v1198 = vadd.f32 0.0, %v1197
  %v1199 = vpop.f32.mrb[0].mxu0
  %v1200 = vpop.f32.mrb[0].mxu0
  %v1201 = vadd.f32 0.0, %v1200
  %v1202 = vpop.f32.mrb[0].mxu0
  %1203 = vmatprep.mubr.bf16.mxu0 0
  %1204 = vmatmul.mubr.bf16.gmra.mrb[0].mxu0 %v1079
  %v1205 = vpop.f32.mrb[0].mxu0
  %v1206 = vadd.f32 0.0, %v1205
  %v1207 = vpop.f32.mrb[0].mxu0
  %v1208 = vpop.f32.mrb[0].mxu0
  %v1209 = vadd.f32 0.0, %v1208
  %v1210 = vpop.f32.mrb[0].mxu0
  %1211 = vmatprep.mubr.bf16.mxu0 0
  %1212 = vmatmul.mubr.bf16.gmra.mrb[0].mxu0 %v1082
  %v1213 = vpop.f32.mrb[0].mxu0
  %v1214 = vadd.f32 0.0, %v1213
  %v1215 = vpop.f32.mrb[0].mxu0
  %v1216 = vpop.f32.mrb[0].mxu0
  %v1217 = vadd.f32 0.0, %v1216
  %v1218 = vpop.f32.mrb[0].mxu0
  %1219 = vmatprep.mubr.bf16.mxu0 0
  %1220 = vmatmul.mubr.bf16.gmra.mrb[0].mxu0 %v1085
  %v1221 = vpop.f32.mrb[0].mxu0
  %v1222 = vadd.f32 0.0, %v1221
  %v1223 = vpop.f32.mrb[0].mxu0
  %v1224 = vpop.f32.mrb[0].mxu0
  %v1225 = vadd.f32 0.0, %v1224
  %v1226 = vpop.f32.mrb[0].mxu0
  %1227 = vmatprep.mubr.bf16.mxu0 0
  %1228 = vmatmul.mubr.bf16.gmra.mrb[0].mxu0 %v1088
  %v1229 = vpop.f32.mrb[0].mxu0
  %v1230 = vadd.f32 0.0, %v1229
  %v1231 = vpop.f32.mrb[0].mxu0
  %v1232 = vpop.f32.mrb[0].mxu0
  %v1233 = vadd.f32 0.0, %v1232
  %v1234 = vpop.f32.mrb[0].mxu0
  %1235 = vmatprep.mubr.bf16.mxu0 0
  %1236 = vmatmul.mubr.bf16.gmra.mrb[0].mxu0 %v1091
  %v1237 = vpop.f32.mrb[0].mxu0
  %v1238 = vadd.f32 0.0, %v1237
  %v1239 = vpop.f32.mrb[0].mxu0
  %v1240 = vpop.f32.mrb[0].mxu0
  %v1241 = vadd.f32 0.0, %v1240
  %v1242 = vpop.f32.mrb[0].mxu0
  %1243 = vmatprep.mubr.bf16.mxu0 0
  %1244 = vmatmul.mubr.bf16.gmra.mrb[0].mxu0 %v1094
  %v1245 = vpop.f32.mrb[0].mxu0
  %v1246 = vadd.f32 0.0, %v1245
  %v1247 = vpop.f32.mrb[0].mxu0
  %v1248 = vpop.f32.mrb[0].mxu0
  %v1249 = vadd.f32 0.0, %v1248
  %v1250 = vpop.f32.mrb[0].mxu0
  %1251 = vmatprep.mubr.bf16.mxu0 0
  %1252 = vmatmul.mubr.bf16.gmra.mrb[0].mxu0 %v1097
  %v1253 = vpop.f32.mrb[0].mxu0
  %v1254 = vadd.f32 0.0, %v1253
  %v1255 = vpop.f32.mrb[0].mxu0
  %v1256 = vpop.f32.mrb[0].mxu0
  %v1257 = vadd.f32 0.0, %v1256
  %v1258 = vpop.f32.mrb[0].mxu0
  %1259 = vdwg.mxu0
  %v1260 = vadd.f32 %v971, %v1134
  %v1261 = vadd.f32 %v972, %v1137
  %v1262 = vadd.f32 %v973, %v1142
  %v1263 = vadd.f32 %v974, %v1145
  %v1264 = vadd.f32 %v975, %v1150
  %v1265 = vadd.f32 %v976, %v1153
  %v1266 = vadd.f32 %v977, %v1158
  %v1267 = vadd.f32 %v978, %v1161
  %v1268 = vadd.f32 %v979, %v1166
  %v1269 = vadd.f32 %v980, %v1169
  %v1270 = vadd.f32 %v981, %v1174
  %v1271 = vadd.f32 %v982, %v1177
  %v1272 = vadd.f32 %v983, %v1182
  %v1273 = vadd.f32 %v984, %v1185
  %v1274 = vadd.f32 %v985, %v1190
  %v1275 = vadd.f32 %v986, %v1193
  %v1276 = vadd.f32 %v987, %v1198
  %v1277 = vadd.f32 %v988, %v1201
  %v1278 = vadd.f32 %v989, %v1206
  %v1279 = vadd.f32 %v990, %v1209
  %v1280 = vadd.f32 %v991, %v1214
  %v1281 = vadd.f32 %v992, %v1217
  %v1282 = vadd.f32 %v993, %v1222
  %v1283 = vadd.f32 %v994, %v1225
  %v1284 = vadd.f32 %v995, %v1230
  %v1285 = vadd.f32 %v996, %v1233
  %v1286 = vadd.f32 %v997, %v1238
  %v1287 = vadd.f32 %v998, %v1241
  %v1288 = vadd.f32 %v999, %v1246
  %v1289 = vadd.f32 %v1000, %v1249
  %v1290 = vadd.f32 %v1001, %v1254
  %v1291 = vadd.f32 %v1002, %v1257
  %v1292 = vlaneseq
  %v1293 = vshrl.u32 %v1292, 7
  %v1294 = vsub.s32 0, %v1293
  %v1295 = vrot.slane %v56, %v1294
  %1297 = vrot.lane.b32.xlu0 %v1295, 64
  %v1298 = vpop.permute.xlu0 %1297
  %v1300 = vadd.f32 %v1134, %v1298
  %v1301 = vadd.f32 %v1137, %v1298
  %v1302 = vadd.f32 %v1142, %v1298
  %v1303 = vadd.f32 %v1145, %v1298
  %v1304 = vadd.f32 %v1150, %v1298
  %v1305 = vadd.f32 %v1153, %v1298
  %v1306 = vadd.f32 %v1158, %v1298
  %v1307 = vadd.f32 %v1161, %v1298
  %v1308 = vadd.f32 %v1166, %v1298
  %v1309 = vadd.f32 %v1169, %v1298
  %v1310 = vadd.f32 %v1174, %v1298
  %v1311 = vadd.f32 %v1177, %v1298
  %v1312 = vadd.f32 %v1182, %v1298
  %v1313 = vadd.f32 %v1185, %v1298
  %v1314 = vadd.f32 %v1190, %v1298
  %v1315 = vadd.f32 %v1193, %v1298
  %v1316 = vadd.f32 %v1198, %v1298
  %v1317 = vadd.f32 %v1201, %v1298
  %v1318 = vadd.f32 %v1206, %v1298
  %v1319 = vadd.f32 %v1209, %v1298
  %v1320 = vadd.f32 %v1214, %v1298
  %v1321 = vadd.f32 %v1217, %v1298
  %v1322 = vadd.f32 %v1222, %v1298
  %v1323 = vadd.f32 %v1225, %v1298
  %v1324 = vadd.f32 %v1230, %v1298
  %v1325 = vadd.f32 %v1233, %v1298
  %v1326 = vadd.f32 %v1238, %v1298
  %v1327 = vadd.f32 %v1241, %v1298
  %v1328 = vadd.f32 %v1246, %v1298
  %v1329 = vadd.f32 %v1249, %v1298
  %v1330 = vadd.f32 %v1254, %v1298
  %v1331 = vadd.f32 %v1257, %v1298
  %v1332 = vxor.u32 %v1300, 2147483648
  %v1333 = vxor.u32 %v1301, 2147483648
  %v1334 = vxor.u32 %v1302, 2147483648
  %v1335 = vxor.u32 %v1303, 2147483648
  %v1336 = vxor.u32 %v1304, 2147483648
  %v1337 = vxor.u32 %v1305, 2147483648
  %v1338 = vxor.u32 %v1306, 2147483648
  %v1339 = vxor.u32 %v1307, 2147483648
  %v1340 = vxor.u32 %v1308, 2147483648
  %v1341 = vxor.u32 %v1309, 2147483648
  %v1342 = vxor.u32 %v1310, 2147483648
  %v1343 = vxor.u32 %v1311, 2147483648
  %v1344 = vxor.u32 %v1312, 2147483648
  %v1345 = vxor.u32 %v1313, 2147483648
  %v1346 = vxor.u32 %v1314, 2147483648
  %v1347 = vxor.u32 %v1315, 2147483648
  %v1348 = vxor.u32 %v1316, 2147483648
  %v1349 = vxor.u32 %v1317, 2147483648
  %v1350 = vxor.u32 %v1318, 2147483648
  %v1351 = vxor.u32 %v1319, 2147483648
  %v1352 = vxor.u32 %v1320, 2147483648
  %v1353 = vxor.u32 %v1321, 2147483648
  %v1354 = vxor.u32 %v1322, 2147483648
  %v1355 = vxor.u32 %v1323, 2147483648
  %v1356 = vxor.u32 %v1324, 2147483648
  %v1357 = vxor.u32 %v1325, 2147483648
  %v1358 = vxor.u32 %v1326, 2147483648
  %v1359 = vxor.u32 %v1327, 2147483648
  %v1360 = vxor.u32 %v1328, 2147483648
  %v1361 = vxor.u32 %v1329, 2147483648
  %v1362 = vxor.u32 %v1330, 2147483648
  %v1363 = vxor.u32 %v1331, 2147483648
  %v1364 = vmul.f32 %v1332, 1.442695
  %v1365 = vpow.pop %v1364
  %v1366 = vmul.f32 %v1333, 1.442695
  %v1367 = vpow.pop %v1366
  %v1368 = vmul.f32 %v1334, 1.442695
  %v1369 = vpow.pop %v1368
  %v1370 = vmul.f32 %v1335, 1.442695
  %v1371 = vpow.pop %v1370
  %v1372 = vmul.f32 %v1336, 1.442695
  %v1373 = vpow.pop %v1372
  %v1374 = vmul.f32 %v1337, 1.442695
  %v1375 = vpow.pop %v1374
  %v1376 = vmul.f32 %v1338, 1.442695
  %v1377 = vpow.pop %v1376
  %v1378 = vmul.f32 %v1339, 1.442695
  %v1379 = vpow.pop %v1378
  %v1380 = vmul.f32 %v1340, 1.442695
  %v1381 = vpow.pop %v1380
  %v1382 = vmul.f32 %v1341, 1.442695
  %v1383 = vpow.pop %v1382
  %v1384 = vmul.f32 %v1342, 1.442695
  %v1385 = vpow.pop %v1384
  %v1386 = vmul.f32 %v1343, 1.442695
  %v1387 = vpow.pop %v1386
  %v1388 = vmul.f32 %v1344, 1.442695
  %v1389 = vpow.pop %v1388
  %v1390 = vmul.f32 %v1345, 1.442695
  %v1391 = vpow.pop %v1390
  %v1392 = vmul.f32 %v1346, 1.442695
  %v1393 = vpow.pop %v1392
  %v1394 = vmul.f32 %v1347, 1.442695
  %v1395 = vpow.pop %v1394
  %v1396 = vmul.f32 %v1348, 1.442695
  %v1397 = vpow.pop %v1396
  %v1398 = vmul.f32 %v1349, 1.442695
  %v1399 = vpow.pop %v1398
  %v1400 = vmul.f32 %v1350, 1.442695
  %v1401 = vpow.pop %v1400
  %v1402 = vmul.f32 %v1351, 1.442695
  %v1403 = vpow.pop %v1402
  %v1404 = vmul.f32 %v1352, 1.442695
  %v1405 = vpow.pop %v1404
  %v1406 = vmul.f32 %v1353, 1.442695
  %v1407 = vpow.pop %v1406
  %v1408 = vmul.f32 %v1354, 1.442695
  %v1409 = vpow.pop %v1408
  %v1410 = vmul.f32 %v1355, 1.442695
  %v1411 = vpow.pop %v1410
  %v1412 = vmul.f32 %v1356, 1.442695
  %v1413 = vpow.pop %v1412
  %v1414 = vmul.f32 %v1357, 1.442695
  %v1415 = vpow.pop %v1414
  %v1416 = vmul.f32 %v1358, 1.442695
  %v1417 = vpow.pop %v1416
  %v1418 = vmul.f32 %v1359, 1.442695
  %v1419 = vpow.pop %v1418
  %v1420 = vmul.f32 %v1360, 1.442695
  %v1421 = vpow.pop %v1420
  %v1422 = vmul.f32 %v1361, 1.442695
  %v1423 = vpow.pop %v1422
  %v1424 = vmul.f32 %v1362, 1.442695
  %v1425 = vpow.pop %v1424
  %v1426 = vmul.f32 %v1363, 1.442695
  %v1427 = vpow.pop %v1426
  %v1428 = vadd.f32 %v1365, 1.0
  %v1429 = vadd.f32 %v1367, 1.0
  %v1430 = vadd.f32 %v1369, 1.0
  %v1431 = vadd.f32 %v1371, 1.0
  %v1432 = vadd.f32 %v1373, 1.0
  %v1433 = vadd.f32 %v1375, 1.0
  %v1434 = vadd.f32 %v1377, 1.0
  %v1435 = vadd.f32 %v1379, 1.0
  %v1436 = vadd.f32 %v1381, 1.0
  %v1437 = vadd.f32 %v1383, 1.0
  %v1438 = vadd.f32 %v1385, 1.0
  %v1439 = vadd.f32 %v1387, 1.0
  %v1440 = vadd.f32 %v1389, 1.0
  %v1441 = vadd.f32 %v1391, 1.0
  %v1442 = vadd.f32 %v1393, 1.0
  %v1443 = vadd.f32 %v1395, 1.0
  %v1444 = vadd.f32 %v1397, 1.0
  %v1445 = vadd.f32 %v1399, 1.0
  %v1446 = vadd.f32 %v1401, 1.0
  %v1447 = vadd.f32 %v1403, 1.0
  %v1448 = vadd.f32 %v1405, 1.0
  %v1449 = vadd.f32 %v1407, 1.0
  %v1450 = vadd.f32 %v1409, 1.0
  %v1451 = vadd.f32 %v1411, 1.0
  %v1452 = vadd.f32 %v1413, 1.0
  %v1453 = vadd.f32 %v1415, 1.0
  %v1454 = vadd.f32 %v1417, 1.0
  %v1455 = vadd.f32 %v1419, 1.0
  %v1456 = vadd.f32 %v1421, 1.0
  %v1457 = vadd.f32 %v1423, 1.0
  %v1458 = vadd.f32 %v1425, 1.0
  %v1459 = vadd.f32 %v1427, 1.0
  %v1460 = vrcp.pop %v1428
  %v1461 = vmul.f32 1.0, %v1460
  %v1462 = vrcp.pop %v1429
  %v1463 = vmul.f32 1.0, %v1462
  %v1464 = vrcp.pop %v1430
  %v1465 = vmul.f32 1.0, %v1464
  %v1466 = vrcp.pop %v1431
  %v1467 = vmul.f32 1.0, %v1466
  %v1468 = vrcp.pop %v1432
  %v1469 = vmul.f32 1.0, %v1468
  %v1470 = vrcp.pop %v1433
  %v1471 = vmul.f32 1.0, %v1470
  %v1472 = vrcp.pop %v1434
  %v1473 = vmul.f32 1.0, %v1472
  %v1474 = vrcp.pop %v1435
  %v1475 = vmul.f32 1.0, %v1474
  %v1476 = vrcp.pop %v1436
  %v1477 = vmul.f32 1.0, %v1476
  %v1478 = vrcp.pop %v1437
  %v1479 = vmul.f32 1.0, %v1478
  %v1480 = vrcp.pop %v1438
  %v1481 = vmul.f32 1.0, %v1480
  %v1482 = vrcp.pop %v1439
  %v1483 = vmul.f32 1.0, %v1482
  %v1484 = vrcp.pop %v1440
  %v1485 = vmul.f32 1.0, %v1484
  %v1486 = vrcp.pop %v1441
  %v1487 = vmul.f32 1.0, %v1486
  %v1488 = vrcp.pop %v1442
  %v1489 = vmul.f32 1.0, %v1488
  %v1490 = vrcp.pop %v1443
  %v1491 = vmul.f32 1.0, %v1490
  %v1492 = vrcp.pop %v1444
  %v1493 = vmul.f32 1.0, %v1492
  %v1494 = vrcp.pop %v1445
  %v1495 = vmul.f32 1.0, %v1494
  %v1496 = vrcp.pop %v1446
  %v1497 = vmul.f32 1.0, %v1496
  %v1498 = vrcp.pop %v1447
  %v1499 = vmul.f32 1.0, %v1498
  %v1500 = vrcp.pop %v1448
  %v1501 = vmul.f32 1.0, %v1500
  %v1502 = vrcp.pop %v1449
  %v1503 = vmul.f32 1.0, %v1502
  %v1504 = vrcp.pop %v1450
  %v1505 = vmul.f32 1.0, %v1504
  %v1506 = vrcp.pop %v1451
  %v1507 = vmul.f32 1.0, %v1506
  %v1508 = vrcp.pop %v1452
  %v1509 = vmul.f32 1.0, %v1508
  %v1510 = vrcp.pop %v1453
  %v1511 = vmul.f32 1.0, %v1510
  %v1512 = vrcp.pop %v1454
  %v1513 = vmul.f32 1.0, %v1512
  %v1514 = vrcp.pop %v1455
  %v1515 = vmul.f32 1.0, %v1514
  %v1516 = vrcp.pop %v1456
  %v1517 = vmul.f32 1.0, %v1516
  %v1518 = vrcp.pop %v1457
  %v1519 = vmul.f32 1.0, %v1518
  %v1520 = vrcp.pop %v1458
  %v1521 = vmul.f32 1.0, %v1520
  %v1522 = vrcp.pop %v1459
  %v1523 = vmul.f32 1.0, %v1522
  %v1524 = vsub.f32 %v971, %v1260
  %v1525 = vsub.f32 %v972, %v1261
  %v1526 = vsub.f32 %v973, %v1262
  %v1527 = vsub.f32 %v974, %v1263
  %v1528 = vsub.f32 %v975, %v1264
  %v1529 = vsub.f32 %v976, %v1265
  %v1530 = vsub.f32 %v977, %v1266
  %v1531 = vsub.f32 %v978, %v1267
  %v1532 = vsub.f32 %v979, %v1268
  %v1533 = vsub.f32 %v980, %v1269
  %v1534 = vsub.f32 %v981, %v1270
  %v1535 = vsub.f32 %v982, %v1271
  %v1536 = vsub.f32 %v983, %v1272
  %v1537 = vsub.f32 %v984, %v1273
  %v1538 = vsub.f32 %v985, %v1274
  %v1539 = vsub.f32 %v986, %v1275
  %v1540 = vsub.f32 %v987, %v1276
  %v1541 = vsub.f32 %v988, %v1277
  %v1542 = vsub.f32 %v989, %v1278
  %v1543 = vsub.f32 %v990, %v1279
  %v1544 = vsub.f32 %v991, %v1280
  %v1545 = vsub.f32 %v992, %v1281
  %v1546 = vsub.f32 %v993, %v1282
  %v1547 = vsub.f32 %v994, %v1283
  %v1548 = vsub.f32 %v995, %v1284
  %v1549 = vsub.f32 %v996, %v1285
  %v1550 = vsub.f32 %v997, %v1286
  %v1551 = vsub.f32 %v998, %v1287
  %v1552 = vsub.f32 %v999, %v1288
  %v1553 = vsub.f32 %v1000, %v1289
  %v1554 = vsub.f32 %v1001, %v1290
  %v1555 = vsub.f32 %v1002, %v1291
  %1588 = vrot.lane.b32.xlu0 %v1524, 64
  %v1589 = vpop.permute.xlu0 %1588
  %1590 = vrot.lane.b32.xlu0 %v1525, 64
  %v1591 = vpop.permute.xlu0 %1590
  %1592 = vrot.lane.b32.xlu0 %v1526, 64
  %v1593 = vpop.permute.xlu0 %1592
  %1594 = vrot.lane.b32.xlu0 %v1527, 64
  %v1595 = vpop.permute.xlu0 %1594
  %1596 = vrot.lane.b32.xlu0 %v1528, 64
  %v1597 = vpop.permute.xlu0 %1596
  %1598 = vrot.lane.b32.xlu0 %v1529, 64
  %v1599 = vpop.permute.xlu0 %1598
  %1600 = vrot.lane.b32.xlu0 %v1530, 64
  %v1601 = vpop.permute.xlu0 %1600
  %1602 = vrot.lane.b32.xlu0 %v1531, 64
  %v1603 = vpop.permute.xlu0 %1602
  %1604 = vrot.lane.b32.xlu0 %v1532, 64
  %v1605 = vpop.permute.xlu0 %1604
  %1606 = vrot.lane.b32.xlu0 %v1533, 64
  %v1607 = vpop.permute.xlu0 %1606
  %1608 = vrot.lane.b32.xlu0 %v1534, 64
  %v1609 = vpop.permute.xlu0 %1608
  %1610 = vrot.lane.b32.xlu0 %v1535, 64
  %v1611 = vpop.permute.xlu0 %1610
  %1612 = vrot.lane.b32.xlu0 %v1536, 64
  %v1613 = vpop.permute.xlu0 %1612
  %1614 = vrot.lane.b32.xlu0 %v1537, 64
  %v1615 = vpop.permute.xlu0 %1614
  %1616 = vrot.lane.b32.xlu0 %v1538, 64
  %v1617 = vpop.permute.xlu0 %1616
  %1618 = vrot.lane.b32.xlu0 %v1539, 64
  %v1619 = vpop.permute.xlu0 %1618
  %1620 = vrot.lane.b32.xlu0 %v1540, 64
  %v1621 = vpop.permute.xlu0 %1620
  %1622 = vrot.lane.b32.xlu0 %v1541, 64
  %v1623 = vpop.permute.xlu0 %1622
  %1624 = vrot.lane.b32.xlu0 %v1542, 64
  %v1625 = vpop.permute.xlu0 %1624
  %1626 = vrot.lane.b32.xlu0 %v1543, 64
  %v1627 = vpop.permute.xlu0 %1626
  %1628 = vrot.lane.b32.xlu0 %v1544, 64
  %v1629 = vpop.permute.xlu0 %1628
  %1630 = vrot.lane.b32.xlu0 %v1545, 64
  %v1631 = vpop.permute.xlu0 %1630
  %1632 = vrot.lane.b32.xlu0 %v1546, 64
  %v1633 = vpop.permute.xlu0 %1632
  %1634 = vrot.lane.b32.xlu0 %v1547, 64
  %v1635 = vpop.permute.xlu0 %1634
  %1636 = vrot.lane.b32.xlu0 %v1548, 64
  %v1637 = vpop.permute.xlu0 %1636
  %1638 = vrot.lane.b32.xlu0 %v1549, 64
  %v1639 = vpop.permute.xlu0 %1638
  %1640 = vrot.lane.b32.xlu0 %v1550, 64
  %v1641 = vpop.permute.xlu0 %1640
  %1642 = vrot.lane.b32.xlu0 %v1551, 64
  %v1643 = vpop.permute.xlu0 %1642
  %1644 = vrot.lane.b32.xlu0 %v1552, 64
  %v1645 = vpop.permute.xlu0 %1644
  %1646 = vrot.lane.b32.xlu0 %v1553, 64
  %v1647 = vpop.permute.xlu0 %1646
  %1648 = vrot.lane.b32.xlu0 %v1554, 64
  %v1649 = vpop.permute.xlu0 %1648
  %1650 = vrot.lane.b32.xlu0 %v1555, 64
  %v1651 = vpop.permute.xlu0 %1650
  %v1684 = vmul.f32 %v1461, %v1589
  %v1685 = vmul.f32 %v1463, %v1591
  %v1686 = vmul.f32 %v1465, %v1593
  %v1687 = vmul.f32 %v1467, %v1595
  %v1688 = vmul.f32 %v1469, %v1597
  %v1689 = vmul.f32 %v1471, %v1599
  %v1690 = vmul.f32 %v1473, %v1601
  %v1691 = vmul.f32 %v1475, %v1603
  %v1692 = vmul.f32 %v1477, %v1605
  %v1693 = vmul.f32 %v1479, %v1607
  %v1694 = vmul.f32 %v1481, %v1609
  %v1695 = vmul.f32 %v1483, %v1611
  %v1696 = vmul.f32 %v1485, %v1613
  %v1697 = vmul.f32 %v1487, %v1615
  %v1698 = vmul.f32 %v1489, %v1617
  %v1699 = vmul.f32 %v1491, %v1619
  %v1700 = vmul.f32 %v1493, %v1621
  %v1701 = vmul.f32 %v1495, %v1623
  %v1702 = vmul.f32 %v1497, %v1625
  %v1703 = vmul.f32 %v1499, %v1627
  %v1704 = vmul.f32 %v1501, %v1629
  %v1705 = vmul.f32 %v1503, %v1631
  %v1706 = vmul.f32 %v1505, %v1633
  %v1707 = vmul.f32 %v1507, %v1635
  %v1708 = vmul.f32 %v1509, %v1637
  %v1709 = vmul.f32 %v1511, %v1639
  %v1710 = vmul.f32 %v1513, %v1641
  %v1711 = vmul.f32 %v1515, %v1643
  %v1712 = vmul.f32 %v1517, %v1645
  %v1713 = vmul.f32 %v1519, %v1647
  %v1714 = vmul.f32 %v1521, %v1649
  %v1715 = vmul.f32 %v1523, %v1651
  %1748 = vrot.lane.b32.xlu0 %v1684, 64
  %v1749 = vpop.permute.xlu0 %1748
  %1750 = vrot.lane.b32.xlu0 %v1685, 64
  %v1751 = vpop.permute.xlu0 %1750
  %1752 = vrot.lane.b32.xlu0 %v1686, 64
  %v1753 = vpop.permute.xlu0 %1752
  %1754 = vrot.lane.b32.xlu0 %v1687, 64
  %v1755 = vpop.permute.xlu0 %1754
  %1756 = vrot.lane.b32.xlu0 %v1688, 64
  %v1757 = vpop.permute.xlu0 %1756
  %1758 = vrot.lane.b32.xlu0 %v1689, 64
  %v1759 = vpop.permute.xlu0 %1758
  %1760 = vrot.lane.b32.xlu0 %v1690, 64
  %v1761 = vpop.permute.xlu0 %1760
  %1762 = vrot.lane.b32.xlu0 %v1691, 64
  %v1763 = vpop.permute.xlu0 %1762
  %1764 = vrot.lane.b32.xlu0 %v1692, 64
  %v1765 = vpop.permute.xlu0 %1764
  %1766 = vrot.lane.b32.xlu0 %v1693, 64
  %v1767 = vpop.permute.xlu0 %1766
  %1768 = vrot.lane.b32.xlu0 %v1694, 64
  %v1769 = vpop.permute.xlu0 %1768
  %1770 = vrot.lane.b32.xlu0 %v1695, 64
  %v1771 = vpop.permute.xlu0 %1770
  %1772 = vrot.lane.b32.xlu0 %v1696, 64
  %v1773 = vpop.permute.xlu0 %1772
  %1774 = vrot.lane.b32.xlu0 %v1697, 64
  %v1775 = vpop.permute.xlu0 %1774
  %1776 = vrot.lane.b32.xlu0 %v1698, 64
  %v1777 = vpop.permute.xlu0 %1776
  %1778 = vrot.lane.b32.xlu0 %v1699, 64
  %v1779 = vpop.permute.xlu0 %1778
  %1780 = vrot.lane.b32.xlu0 %v1700, 64
  %v1781 = vpop.permute.xlu0 %1780
  %1782 = vrot.lane.b32.xlu0 %v1701, 64
  %v1783 = vpop.permute.xlu0 %1782
  %1784 = vrot.lane.b32.xlu0 %v1702, 64
  %v1785 = vpop.permute.xlu0 %1784
  %1786 = vrot.lane.b32.xlu0 %v1703, 64
  %v1787 = vpop.permute.xlu0 %1786
  %1788 = vrot.lane.b32.xlu0 %v1704, 64
  %v1789 = vpop.permute.xlu0 %1788
  %1790 = vrot.lane.b32.xlu0 %v1705, 64
  %v1791 = vpop.permute.xlu0 %1790
  %1792 = vrot.lane.b32.xlu0 %v1706, 64
  %v1793 = vpop.permute.xlu0 %1792
  %1794 = vrot.lane.b32.xlu0 %v1707, 64
  %v1795 = vpop.permute.xlu0 %1794
  %1796 = vrot.lane.b32.xlu0 %v1708, 64
  %v1797 = vpop.permute.xlu0 %1796
  %1798 = vrot.lane.b32.xlu0 %v1709, 64
  %v1799 = vpop.permute.xlu0 %1798
  %1800 = vrot.lane.b32.xlu0 %v1710, 64
  %v1801 = vpop.permute.xlu0 %1800
  %1802 = vrot.lane.b32.xlu0 %v1711, 64
  %v1803 = vpop.permute.xlu0 %1802
  %1804 = vrot.lane.b32.xlu0 %v1712, 64
  %v1805 = vpop.permute.xlu0 %1804
  %1806 = vrot.lane.b32.xlu0 %v1713, 64
  %v1807 = vpop.permute.xlu0 %1806
  %1808 = vrot.lane.b32.xlu0 %v1714, 64
  %v1809 = vpop.permute.xlu0 %1808
  %1810 = vrot.lane.b32.xlu0 %v1715, 64
  %v1811 = vpop.permute.xlu0 %1810
  %v1844 = vadd.f32 %v1260, %v1749
  %v1845 = vadd.f32 %v1261, %v1751
  %v1846 = vadd.f32 %v1262, %v1753
  %v1847 = vadd.f32 %v1263, %v1755
  %v1848 = vadd.f32 %v1264, %v1757
  %v1849 = vadd.f32 %v1265, %v1759
  %v1850 = vadd.f32 %v1266, %v1761
  %v1851 = vadd.f32 %v1267, %v1763
  %v1852 = vadd.f32 %v1268, %v1765
  %v1853 = vadd.f32 %v1269, %v1767
  %v1854 = vadd.f32 %v1270, %v1769
  %v1855 = vadd.f32 %v1271, %v1771
  %v1856 = vadd.f32 %v1272, %v1773
  %v1857 = vadd.f32 %v1273, %v1775
  %v1858 = vadd.f32 %v1274, %v1777
  %v1859 = vadd.f32 %v1275, %v1779
  %v1860 = vadd.f32 %v1276, %v1781
  %v1861 = vadd.f32 %v1277, %v1783
  %v1862 = vadd.f32 %v1278, %v1785
  %v1863 = vadd.f32 %v1279, %v1787
  %v1864 = vadd.f32 %v1280, %v1789
  %v1865 = vadd.f32 %v1281, %v1791
  %v1866 = vadd.f32 %v1282, %v1793
  %v1867 = vadd.f32 %v1283, %v1795
  %v1868 = vadd.f32 %v1284, %v1797
  %v1869 = vadd.f32 %v1285, %v1799
  %v1870 = vadd.f32 %v1286, %v1801
  %v1871 = vadd.f32 %v1287, %v1803
  %v1872 = vadd.f32 %v1288, %v1805
  %v1873 = vadd.f32 %v1289, %v1807
  %v1874 = vadd.f32 %v1290, %v1809
  %v1875 = vadd.f32 %v1291, %v1811
  %v1876 = vpack.c.bf16 %v1845, %v1844
  %v1877 = vpack.c.bf16 %v1847, %v1846
  %v1878 = vpack.c.bf16 %v1849, %v1848
  %v1879 = vpack.c.bf16 %v1851, %v1850
  %v1880 = vpack.c.bf16 %v1853, %v1852
  %v1881 = vpack.c.bf16 %v1855, %v1854
  %v1882 = vpack.c.bf16 %v1857, %v1856
  %v1883 = vpack.c.bf16 %v1859, %v1858
  %v1884 = vpack.c.bf16 %v1861, %v1860
  %v1885 = vpack.c.bf16 %v1863, %v1862
  %v1886 = vpack.c.bf16 %v1865, %v1864
  %v1887 = vpack.c.bf16 %v1867, %v1866
  %v1888 = vpack.c.bf16 %v1869, %v1868
  %v1889 = vpack.c.bf16 %v1871, %v1870
  %v1890 = vpack.c.bf16 %v1873, %v1872
  %v1891 = vpack.c.bf16 %v1875, %v1874
  %v1892 = vld [vmem:[%s3] sm:$0xf]
  %v1893 = vld [vmem:[%s3 + $0x4] sm:$0xf]
  %v1894 = vld [vmem:[%s3 + $0x8] sm:$0xf]
  %v1895 = vld [vmem:[%s3 + $0xc] sm:$0xf]
  %v1896 = vld [vmem:[%s3 + $0x10] sm:$0xf]
  %v1897 = vld [vmem:[%s3 + $0x14] sm:$0xf]
  %v1898 = vld [vmem:[%s3 + $0x18] sm:$0xf]
  %v1899 = vld [vmem:[%s3 + $0x1c] sm:$0xf]
  %v1900 = vlaneseq
  %v1901 = vshrl.u32 %v1900, 7
  %v1902 = vsub.s32 0, %v1901
  %v1903 = vrot.slane %v57, %v1902
  %v1912 = vunpack.c.l.b16 %v1892
  %v1913 = vunpack.c.l.b16 %v1893
  %v1914 = vunpack.c.l.b16 %v1894
  %v1915 = vunpack.c.l.b16 %v1895
  %v1916 = vunpack.c.l.b16 %v1896
  %v1917 = vunpack.c.l.b16 %v1897
  %v1918 = vunpack.c.l.b16 %v1898
  %v1919 = vunpack.c.l.b16 %v1899
  %v1920 = vpack.c.b16 %v1913, %v1912
  %v1921 = vpack.c.b16 %v1915, %v1914
  %v1922 = vpack.c.b16 %v1917, %v1916
  %v1923 = vpack.c.b16 %v1919, %v1918
  %v1929 = vsel %vm176, %v1876, 0
  %v1932 = vsel %vm176, %v1877, 0
  %v1935 = vsel %vm176, %v1878, 0
  %v1938 = vsel %vm176, %v1879, 0
  %v1941 = vsel %vm176, %v1880, 0
  %v1944 = vsel %vm176, %v1881, 0
  %v1947 = vsel %vm176, %v1882, 0
  %v1950 = vsel %vm176, %v1883, 0
  %v1953 = vsel %vm176, %v1884, 0
  %v1956 = vsel %vm176, %v1885, 0
  %v1959 = vsel %vm176, %v1886, 0
  %v1962 = vsel %vm176, %v1887, 0
  %v1965 = vsel %vm176, %v1888, 0
  %v1968 = vsel %vm176, %v1889, 0
  %v1971 = vsel %vm176, %v1890, 0
  %v1974 = vsel %vm176, %v1891, 0
  %1976 = vmatprep.subr.bf16.mxu0 0
  %1977 = vmatpush1.bf16.msra.mxu0 %v1920
  %1978 = vmatprep.subr.bf16.mxu0 0
  %1979 = vmatpush1.bf16.msra.mxu0 %v1921
  %1980 = vmatprep.subr.bf16.mxu0 0
  %1981 = vmatpush1.bf16.msra.mxu0 %v1922
  %1982 = vmatprep.subr.bf16.mxu0 0
  %1983 = vmatpush1.bf16.msra.mxu0 %v1923
  %1984 = vmatprep.subr.bf16.mxu0 0
  %1985 = vmatpush1.bf16.msra.mxu0 0
  %1986 = vmatprep.subr.bf16.mxu0 0
  %1987 = vmatpush1.bf16.msra.mxu0 0
  %1988 = vmatprep.subr.bf16.mxu0 0
  %1989 = vmatpush1.bf16.msra.mxu0 0
  %1990 = vmatprep.subr.bf16.mxu0 0
  %1991 = vmatpush1.bf16.msra.mxu0 0
  %1992 = vmatprep.subr.bf16.mxu0 0
  %1993 = vmatpush1.bf16.msra.mxu0 0
  %1994 = vmatprep.subr.bf16.mxu0 0
  %1995 = vmatpush1.bf16.msra.mxu0 0
  %1996 = vmatprep.subr.bf16.mxu0 0
  %1997 = vmatpush1.bf16.msra.mxu0 0
  %1998 = vmatprep.subr.bf16.mxu0 0
  %1999 = vmatpush1.bf16.msra.mxu0 0
  %2000 = vmatprep.subr.bf16.mxu0 0
  %2001 = vmatpush1.bf16.msra.mxu0 0
  %2002 = vmatprep.subr.bf16.mxu0 0
  %2003 = vmatpush1.bf16.msra.mxu0 0
  %2004 = vmatprep.subr.bf16.mxu0 0
  %2005 = vmatpush1.bf16.msra.mxu0 0
  %2006 = vmatprep.subr.bf16.mxu0 0
  %2007 = vmatpush1.bf16.msra.mxu0 0
  %2008 = vmatprep.mubr.bf16.mxu0 0
  %2009 = vmatmul.mubr.bf16.gmra.mrb[0].mxu0 %v1929
  %v2010 = vpop.f32.mrb[0].mxu0
  %v2011 = vadd.f32 %v1903, %v2010
  %v2012 = vpop.f32.mrb[0].mxu0
  %v2013 = vpop.f32.mrb[0].mxu0
  %v2014 = vadd.f32 %v1903, %v2013
  %v2015 = vpop.f32.mrb[0].mxu0
  %2016 = vmatprep.mubr.bf16.mxu0 0
  %2017 = vmatmul.mubr.bf16.gmra.mrb[0].mxu0 %v1932
  %v2018 = vpop.f32.mrb[0].mxu0
  %v2019 = vadd.f32 %v1903, %v2018
  %v2020 = vpop.f32.mrb[0].mxu0
  %v2021 = vpop.f32.mrb[0].mxu0
  %v2022 = vadd.f32 %v1903, %v2021
  %v2023 = vpop.f32.mrb[0].mxu0
  %2024 = vmatprep.mubr.bf16.mxu0 0
  %2025 = vmatmul.mubr.bf16.gmra.mrb[0].mxu0 %v1935
  %v2026 = vpop.f32.mrb[0].mxu0
  %v2027 = vadd.f32 %v1903, %v2026
  %v2028 = vpop.f32.mrb[0].mxu0
  %v2029 = vpop.f32.mrb[0].mxu0
  %v2030 = vadd.f32 %v1903, %v2029
  %v2031 = vpop.f32.mrb[0].mxu0
  %2032 = vmatprep.mubr.bf16.mxu0 0
  %2033 = vmatmul.mubr.bf16.gmra.mrb[0].mxu0 %v1938
  %v2034 = vpop.f32.mrb[0].mxu0
  %v2035 = vadd.f32 %v1903, %v2034
  %v2036 = vpop.f32.mrb[0].mxu0
  %v2037 = vpop.f32.mrb[0].mxu0
  %v2038 = vadd.f32 %v1903, %v2037
  %v2039 = vpop.f32.mrb[0].mxu0
  %2040 = vmatprep.mubr.bf16.mxu0 0
  %2041 = vmatmul.mubr.bf16.gmra.mrb[0].mxu0 %v1941
  %v2042 = vpop.f32.mrb[0].mxu0
  %v2043 = vadd.f32 %v1903, %v2042
  %v2044 = vpop.f32.mrb[0].mxu0
  %v2045 = vpop.f32.mrb[0].mxu0
  %v2046 = vadd.f32 %v1903, %v2045
  %v2047 = vpop.f32.mrb[0].mxu0
  %2048 = vmatprep.mubr.bf16.mxu0 0
  %2049 = vmatmul.mubr.bf16.gmra.mrb[0].mxu0 %v1944
  %v2050 = vpop.f32.mrb[0].mxu0
  %v2051 = vadd.f32 %v1903, %v2050
  %v2052 = vpop.f32.mrb[0].mxu0
  %v2053 = vpop.f32.mrb[0].mxu0
  %v2054 = vadd.f32 %v1903, %v2053
  %v2055 = vpop.f32.mrb[0].mxu0
  %2056 = vmatprep.mubr.bf16.mxu0 0
  %2057 = vmatmul.mubr.bf16.gmra.mrb[0].mxu0 %v1947
  %v2058 = vpop.f32.mrb[0].mxu0
  %v2059 = vadd.f32 %v1903, %v2058
  %v2060 = vpop.f32.mrb[0].mxu0
  %v2061 = vpop.f32.mrb[0].mxu0
  %v2062 = vadd.f32 %v1903, %v2061
  %v2063 = vpop.f32.mrb[0].mxu0
  %2064 = vmatprep.mubr.bf16.mxu0 0
  %2065 = vmatmul.mubr.bf16.gmra.mrb[0].mxu0 %v1950
  %v2066 = vpop.f32.mrb[0].mxu0
  %v2067 = vadd.f32 %v1903, %v2066
  %v2068 = vpop.f32.mrb[0].mxu0
  %v2069 = vpop.f32.mrb[0].mxu0
  %v2070 = vadd.f32 %v1903, %v2069
  %v2071 = vpop.f32.mrb[0].mxu0
  %2072 = vmatprep.mubr.bf16.mxu0 0
  %2073 = vmatmul.mubr.bf16.gmra.mrb[0].mxu0 %v1953
  %v2074 = vpop.f32.mrb[0].mxu0
  %v2075 = vadd.f32 %v1903, %v2074
  %v2076 = vpop.f32.mrb[0].mxu0
  %v2077 = vpop.f32.mrb[0].mxu0
  %v2078 = vadd.f32 %v1903, %v2077
  %v2079 = vpop.f32.mrb[0].mxu0
  %2080 = vmatprep.mubr.bf16.mxu0 0
  %2081 = vmatmul.mubr.bf16.gmra.mrb[0].mxu0 %v1956
  %v2082 = vpop.f32.mrb[0].mxu0
  %v2083 = vadd.f32 %v1903, %v2082
  %v2084 = vpop.f32.mrb[0].mxu0
  %v2085 = vpop.f32.mrb[0].mxu0
  %v2086 = vadd.f32 %v1903, %v2085
  %v2087 = vpop.f32.mrb[0].mxu0
  %2088 = vmatprep.mubr.bf16.mxu0 0
  %2089 = vmatmul.mubr.bf16.gmra.mrb[0].mxu0 %v1959
  %v2090 = vpop.f32.mrb[0].mxu0
  %v2091 = vadd.f32 %v1903, %v2090
  %v2092 = vpop.f32.mrb[0].mxu0
  %v2093 = vpop.f32.mrb[0].mxu0
  %v2094 = vadd.f32 %v1903, %v2093
  %v2095 = vpop.f32.mrb[0].mxu0
  %2096 = vmatprep.mubr.bf16.mxu0 0
  %2097 = vmatmul.mubr.bf16.gmra.mrb[0].mxu0 %v1962
  %v2098 = vpop.f32.mrb[0].mxu0
  %v2099 = vadd.f32 %v1903, %v2098
  %v2100 = vpop.f32.mrb[0].mxu0
  %v2101 = vpop.f32.mrb[0].mxu0
  %v2102 = vadd.f32 %v1903, %v2101
  %v2103 = vpop.f32.mrb[0].mxu0
  %2104 = vmatprep.mubr.bf16.mxu0 0
  %2105 = vmatmul.mubr.bf16.gmra.mrb[0].mxu0 %v1965
  %v2106 = vpop.f32.mrb[0].mxu0
  %v2107 = vadd.f32 %v1903, %v2106
  %v2108 = vpop.f32.mrb[0].mxu0
  %v2109 = vpop.f32.mrb[0].mxu0
  %v2110 = vadd.f32 %v1903, %v2109
  %v2111 = vpop.f32.mrb[0].mxu0
  %2112 = vmatprep.mubr.bf16.mxu0 0
  %2113 = vmatmul.mubr.bf16.gmra.mrb[0].mxu0 %v1968
  %v2114 = vpop.f32.mrb[0].mxu0
  %v2115 = vadd.f32 %v1903, %v2114
  %v2116 = vpop.f32.mrb[0].mxu0
  %v2117 = vpop.f32.mrb[0].mxu0
  %v2118 = vadd.f32 %v1903, %v2117
  %v2119 = vpop.f32.mrb[0].mxu0
  %2120 = vmatprep.mubr.bf16.mxu0 0
  %2121 = vmatmul.mubr.bf16.gmra.mrb[0].mxu0 %v1971
  %v2122 = vpop.f32.mrb[0].mxu0
  %v2123 = vadd.f32 %v1903, %v2122
  %v2124 = vpop.f32.mrb[0].mxu0
  %v2125 = vpop.f32.mrb[0].mxu0
  %v2126 = vadd.f32 %v1903, %v2125
  %v2127 = vpop.f32.mrb[0].mxu0
  %2128 = vmatprep.mubr.bf16.mxu0 0
  %2129 = vmatmul.mubr.bf16.gmra.mrb[0].mxu0 %v1974
  %v2130 = vpop.f32.mrb[0].mxu0
  %v2131 = vadd.f32 %v1903, %v2130
  %v2132 = vpop.f32.mrb[0].mxu0
  %v2133 = vpop.f32.mrb[0].mxu0
  %v2134 = vadd.f32 %v1903, %v2133
  %v2135 = vpop.f32.mrb[0].mxu0
  %2136 = vdwg.mxu0
  %v2137 = vsel %vm176, %v2011, 0.0
  %2138 = vadd.xlane.f32.xlu0 %v2137
  %v2139 = vpop.xlane.xlu0 %2138
  %v2140 = vsel %vm176, %v2014, 0.0
  %2141 = vadd.xlane.f32.xlu0 %v2140
  %v2142 = vpop.xlane.xlu0 %2141
  %v2143 = vsel %vm176, %v2019, 0.0
  %2144 = vadd.xlane.f32.xlu0 %v2143
  %v2145 = vpop.xlane.xlu0 %2144
  %v2146 = vsel %vm176, %v2022, 0.0
  %2147 = vadd.xlane.f32.xlu0 %v2146
  %v2148 = vpop.xlane.xlu0 %2147
  %v2149 = vsel %vm176, %v2027, 0.0
  %2150 = vadd.xlane.f32.xlu0 %v2149
  %v2151 = vpop.xlane.xlu0 %2150
  %v2152 = vsel %vm176, %v2030, 0.0
  %2153 = vadd.xlane.f32.xlu0 %v2152
  %v2154 = vpop.xlane.xlu0 %2153
  %v2155 = vsel %vm176, %v2035, 0.0
  %2156 = vadd.xlane.f32.xlu0 %v2155
  %v2157 = vpop.xlane.xlu0 %2156
  %v2158 = vsel %vm176, %v2038, 0.0
  %2159 = vadd.xlane.f32.xlu0 %v2158
  %v2160 = vpop.xlane.xlu0 %2159
  %v2161 = vsel %vm176, %v2043, 0.0
  %2162 = vadd.xlane.f32.xlu0 %v2161
  %v2163 = vpop.xlane.xlu0 %2162
  %v2164 = vsel %vm176, %v2046, 0.0
  %2165 = vadd.xlane.f32.xlu0 %v2164
  %v2166 = vpop.xlane.xlu0 %2165
  %v2167 = vsel %vm176, %v2051, 0.0
  %2168 = vadd.xlane.f32.xlu0 %v2167
  %v2169 = vpop.xlane.xlu0 %2168
  %v2170 = vsel %vm176, %v2054, 0.0
  %2171 = vadd.xlane.f32.xlu0 %v2170
  %v2172 = vpop.xlane.xlu0 %2171
  %v2173 = vsel %vm176, %v2059, 0.0
  %2174 = vadd.xlane.f32.xlu0 %v2173
  %v2175 = vpop.xlane.xlu0 %2174
  %v2176 = vsel %vm176, %v2062, 0.0
  %2177 = vadd.xlane.f32.xlu0 %v2176
  %v2178 = vpop.xlane.xlu0 %2177
  %v2179 = vsel %vm176, %v2067, 0.0
  %2180 = vadd.xlane.f32.xlu0 %v2179
  %v2181 = vpop.xlane.xlu0 %2180
  %v2182 = vsel %vm176, %v2070, 0.0
  %2183 = vadd.xlane.f32.xlu0 %v2182
  %v2184 = vpop.xlane.xlu0 %2183
  %v2185 = vsel %vm176, %v2075, 0.0
  %2186 = vadd.xlane.f32.xlu0 %v2185
  %v2187 = vpop.xlane.xlu0 %2186
  %v2188 = vsel %vm176, %v2078, 0.0
  %2189 = vadd.xlane.f32.xlu0 %v2188
  %v2190 = vpop.xlane.xlu0 %2189
  %v2191 = vsel %vm176, %v2083, 0.0
  %2192 = vadd.xlane.f32.xlu0 %v2191
  %v2193 = vpop.xlane.xlu0 %2192
  %v2194 = vsel %vm176, %v2086, 0.0
  %2195 = vadd.xlane.f32.xlu0 %v2194
  %v2196 = vpop.xlane.xlu0 %2195
  %v2197 = vsel %vm176, %v2091, 0.0
  %2198 = vadd.xlane.f32.xlu0 %v2197
  %v2199 = vpop.xlane.xlu0 %2198
  %v2200 = vsel %vm176, %v2094, 0.0
  %2201 = vadd.xlane.f32.xlu0 %v2200
  %v2202 = vpop.xlane.xlu0 %2201
  %v2203 = vsel %vm176, %v2099, 0.0
  %2204 = vadd.xlane.f32.xlu0 %v2203
  %v2205 = vpop.xlane.xlu0 %2204
  %v2206 = vsel %vm176, %v2102, 0.0
  %2207 = vadd.xlane.f32.xlu0 %v2206
  %v2208 = vpop.xlane.xlu0 %2207
  %v2209 = vsel %vm176, %v2107, 0.0
  %2210 = vadd.xlane.f32.xlu0 %v2209
  %v2211 = vpop.xlane.xlu0 %2210
  %v2212 = vsel %vm176, %v2110, 0.0
  %2213 = vadd.xlane.f32.xlu0 %v2212
  %v2214 = vpop.xlane.xlu0 %2213
  %v2215 = vsel %vm176, %v2115, 0.0
  %2216 = vadd.xlane.f32.xlu0 %v2215
  %v2217 = vpop.xlane.xlu0 %2216
  %v2218 = vsel %vm176, %v2118, 0.0
  %2219 = vadd.xlane.f32.xlu0 %v2218
  %v2220 = vpop.xlane.xlu0 %2219
  %v2221 = vsel %vm176, %v2123, 0.0
  %2222 = vadd.xlane.f32.xlu0 %v2221
  %v2223 = vpop.xlane.xlu0 %2222
  %v2224 = vsel %vm176, %v2126, 0.0
  %2225 = vadd.xlane.f32.xlu0 %v2224
  %v2226 = vpop.xlane.xlu0 %2225
  %v2227 = vsel %vm176, %v2131, 0.0
  %2228 = vadd.xlane.f32.xlu0 %v2227
  %v2229 = vpop.xlane.xlu0 %2228
  %v2230 = vsel %vm176, %v2134, 0.0
  %2231 = vadd.xlane.f32.xlu0 %v2230
  %v2232 = vpop.xlane.xlu0 %2231
  %v2233 = vmul.f32 %v2139, %v482
  %v2234 = vmul.f32 %v2142, %v482
  %v2235 = vmul.f32 %v2145, %v482
  %v2236 = vmul.f32 %v2148, %v482
  %v2237 = vmul.f32 %v2151, %v482
  %v2238 = vmul.f32 %v2154, %v482
  %v2239 = vmul.f32 %v2157, %v482
  %v2240 = vmul.f32 %v2160, %v482
  %v2241 = vmul.f32 %v2163, %v482
  %v2242 = vmul.f32 %v2166, %v482
  %v2243 = vmul.f32 %v2169, %v482
  %v2244 = vmul.f32 %v2172, %v482
  %v2245 = vmul.f32 %v2175, %v482
  %v2246 = vmul.f32 %v2178, %v482
  %v2247 = vmul.f32 %v2181, %v482
  %v2248 = vmul.f32 %v2184, %v482
  %v2249 = vmul.f32 %v2187, %v482
  %v2250 = vmul.f32 %v2190, %v482
  %v2251 = vmul.f32 %v2193, %v482
  %v2252 = vmul.f32 %v2196, %v482
  %v2253 = vmul.f32 %v2199, %v482
  %v2254 = vmul.f32 %v2202, %v482
  %v2255 = vmul.f32 %v2205, %v482
  %v2256 = vmul.f32 %v2208, %v482
  %v2257 = vmul.f32 %v2211, %v482
  %v2258 = vmul.f32 %v2214, %v482
  %v2259 = vmul.f32 %v2217, %v482
  %v2260 = vmul.f32 %v2220, %v482
  %v2261 = vmul.f32 %v2223, %v482
  %v2262 = vmul.f32 %v2226, %v482
  %v2263 = vmul.f32 %v2229, %v482
  %v2264 = vmul.f32 %v2232, %v482
  %v2265 = vmul.f32 %v2011, %v2011
  %v2266 = vmul.f32 %v2014, %v2014
  %v2267 = vmul.f32 %v2019, %v2019
  %v2268 = vmul.f32 %v2022, %v2022
  %v2269 = vmul.f32 %v2027, %v2027
  %v2270 = vmul.f32 %v2030, %v2030
  %v2271 = vmul.f32 %v2035, %v2035
  %v2272 = vmul.f32 %v2038, %v2038
  %v2273 = vmul.f32 %v2043, %v2043
  %v2274 = vmul.f32 %v2046, %v2046
  %v2275 = vmul.f32 %v2051, %v2051
  %v2276 = vmul.f32 %v2054, %v2054
  %v2277 = vmul.f32 %v2059, %v2059
  %v2278 = vmul.f32 %v2062, %v2062
  %v2279 = vmul.f32 %v2067, %v2067
  %v2280 = vmul.f32 %v2070, %v2070
  %v2281 = vmul.f32 %v2075, %v2075
  %v2282 = vmul.f32 %v2078, %v2078
  %v2283 = vmul.f32 %v2083, %v2083
  %v2284 = vmul.f32 %v2086, %v2086
  %v2285 = vmul.f32 %v2091, %v2091
  %v2286 = vmul.f32 %v2094, %v2094
  %v2287 = vmul.f32 %v2099, %v2099
  %v2288 = vmul.f32 %v2102, %v2102
  %v2289 = vmul.f32 %v2107, %v2107
  %v2290 = vmul.f32 %v2110, %v2110
  %v2291 = vmul.f32 %v2115, %v2115
  %v2292 = vmul.f32 %v2118, %v2118
  %v2293 = vmul.f32 %v2123, %v2123
  %v2294 = vmul.f32 %v2126, %v2126
  %v2295 = vmul.f32 %v2131, %v2131
  %v2296 = vmul.f32 %v2134, %v2134
  %v2297 = vsel %vm176, %v2265, 0.0
  %2298 = vadd.xlane.f32.xlu0 %v2297
  %v2299 = vpop.xlane.xlu0 %2298
  %v2300 = vsel %vm176, %v2266, 0.0
  %2301 = vadd.xlane.f32.xlu0 %v2300
  %v2302 = vpop.xlane.xlu0 %2301
  %v2303 = vsel %vm176, %v2267, 0.0
  %2304 = vadd.xlane.f32.xlu0 %v2303
  %v2305 = vpop.xlane.xlu0 %2304
  %v2306 = vsel %vm176, %v2268, 0.0
  %2307 = vadd.xlane.f32.xlu0 %v2306
  %v2308 = vpop.xlane.xlu0 %2307
  %v2309 = vsel %vm176, %v2269, 0.0
  %2310 = vadd.xlane.f32.xlu0 %v2309
  %v2311 = vpop.xlane.xlu0 %2310
  %v2312 = vsel %vm176, %v2270, 0.0
  %2313 = vadd.xlane.f32.xlu0 %v2312
  %v2314 = vpop.xlane.xlu0 %2313
  %v2315 = vsel %vm176, %v2271, 0.0
  %2316 = vadd.xlane.f32.xlu0 %v2315
  %v2317 = vpop.xlane.xlu0 %2316
  %v2318 = vsel %vm176, %v2272, 0.0
  %2319 = vadd.xlane.f32.xlu0 %v2318
  %v2320 = vpop.xlane.xlu0 %2319
  %v2321 = vsel %vm176, %v2273, 0.0
  %2322 = vadd.xlane.f32.xlu0 %v2321
  %v2323 = vpop.xlane.xlu0 %2322
  %v2324 = vsel %vm176, %v2274, 0.0
  %2325 = vadd.xlane.f32.xlu0 %v2324
  %v2326 = vpop.xlane.xlu0 %2325
  %v2327 = vsel %vm176, %v2275, 0.0
  %2328 = vadd.xlane.f32.xlu0 %v2327
  %v2329 = vpop.xlane.xlu0 %2328
  %v2330 = vsel %vm176, %v2276, 0.0
  %2331 = vadd.xlane.f32.xlu0 %v2330
  %v2332 = vpop.xlane.xlu0 %2331
  %v2333 = vsel %vm176, %v2277, 0.0
  %2334 = vadd.xlane.f32.xlu0 %v2333
  %v2335 = vpop.xlane.xlu0 %2334
  %v2336 = vsel %vm176, %v2278, 0.0
  %2337 = vadd.xlane.f32.xlu0 %v2336
  %v2338 = vpop.xlane.xlu0 %2337
  %v2339 = vsel %vm176, %v2279, 0.0
  %2340 = vadd.xlane.f32.xlu0 %v2339
  %v2341 = vpop.xlane.xlu0 %2340
  %v2342 = vsel %vm176, %v2280, 0.0
  %2343 = vadd.xlane.f32.xlu0 %v2342
  %v2344 = vpop.xlane.xlu0 %2343
  %v2345 = vsel %vm176, %v2281, 0.0
  %2346 = vadd.xlane.f32.xlu0 %v2345
  %v2347 = vpop.xlane.xlu0 %2346
  %v2348 = vsel %vm176, %v2282, 0.0
  %2349 = vadd.xlane.f32.xlu0 %v2348
  %v2350 = vpop.xlane.xlu0 %2349
  %v2351 = vsel %vm176, %v2283, 0.0
  %2352 = vadd.xlane.f32.xlu0 %v2351
  %v2353 = vpop.xlane.xlu0 %2352
  %v2354 = vsel %vm176, %v2284, 0.0
  %2355 = vadd.xlane.f32.xlu0 %v2354
  %v2356 = vpop.xlane.xlu0 %2355
  %v2357 = vsel %vm176, %v2285, 0.0
  %2358 = vadd.xlane.f32.xlu0 %v2357
  %v2359 = vpop.xlane.xlu0 %2358
  %v2360 = vsel %vm176, %v2286, 0.0
  %2361 = vadd.xlane.f32.xlu0 %v2360
  %v2362 = vpop.xlane.xlu0 %2361
  %v2363 = vsel %vm176, %v2287, 0.0
  %2364 = vadd.xlane.f32.xlu0 %v2363
  %v2365 = vpop.xlane.xlu0 %2364
  %v2366 = vsel %vm176, %v2288, 0.0
  %2367 = vadd.xlane.f32.xlu0 %v2366
  %v2368 = vpop.xlane.xlu0 %2367
  %v2369 = vsel %vm176, %v2289, 0.0
  %2370 = vadd.xlane.f32.xlu0 %v2369
  %v2371 = vpop.xlane.xlu0 %2370
  %v2372 = vsel %vm176, %v2290, 0.0
  %2373 = vadd.xlane.f32.xlu0 %v2372
  %v2374 = vpop.xlane.xlu0 %2373
  %v2375 = vsel %vm176, %v2291, 0.0
  %2376 = vadd.xlane.f32.xlu0 %v2375
  %v2377 = vpop.xlane.xlu0 %2376
  %v2378 = vsel %vm176, %v2292, 0.0
  %2379 = vadd.xlane.f32.xlu0 %v2378
  %v2380 = vpop.xlane.xlu0 %2379
  %v2381 = vsel %vm176, %v2293, 0.0
  %2382 = vadd.xlane.f32.xlu0 %v2381
  %v2383 = vpop.xlane.xlu0 %2382
  %v2384 = vsel %vm176, %v2294, 0.0
  %2385 = vadd.xlane.f32.xlu0 %v2384
  %v2386 = vpop.xlane.xlu0 %2385
  %v2387 = vsel %vm176, %v2295, 0.0
  %2388 = vadd.xlane.f32.xlu0 %v2387
  %v2389 = vpop.xlane.xlu0 %2388
  %v2390 = vsel %vm176, %v2296, 0.0
  %2391 = vadd.xlane.f32.xlu0 %v2390
  %v2392 = vpop.xlane.xlu0 %2391
  %v2393 = vmul.f32 %v2299, %v482
  %v2394 = vmul.f32 %v2302, %v482
  %v2395 = vmul.f32 %v2305, %v482
  %v2396 = vmul.f32 %v2308, %v482
  %v2397 = vmul.f32 %v2311, %v482
  %v2398 = vmul.f32 %v2314, %v482
  %v2399 = vmul.f32 %v2317, %v482
  %v2400 = vmul.f32 %v2320, %v482
  %v2401 = vmul.f32 %v2323, %v482
  %v2402 = vmul.f32 %v2326, %v482
  %v2403 = vmul.f32 %v2329, %v482
  %v2404 = vmul.f32 %v2332, %v482
  %v2405 = vmul.f32 %v2335, %v482
  %v2406 = vmul.f32 %v2338, %v482
  %v2407 = vmul.f32 %v2341, %v482
  %v2408 = vmul.f32 %v2344, %v482
  %v2409 = vmul.f32 %v2347, %v482
  %v2410 = vmul.f32 %v2350, %v482
  %v2411 = vmul.f32 %v2353, %v482
  %v2412 = vmul.f32 %v2356, %v482
  %v2413 = vmul.f32 %v2359, %v482
  %v2414 = vmul.f32 %v2362, %v482
  %v2415 = vmul.f32 %v2365, %v482
  %v2416 = vmul.f32 %v2368, %v482
  %v2417 = vmul.f32 %v2371, %v482
  %v2418 = vmul.f32 %v2374, %v482
  %v2419 = vmul.f32 %v2377, %v482
  %v2420 = vmul.f32 %v2380, %v482
  %v2421 = vmul.f32 %v2383, %v482
  %v2422 = vmul.f32 %v2386, %v482
  %v2423 = vmul.f32 %v2389, %v482
  %v2424 = vmul.f32 %v2392, %v482
  %v2425 = vmul.f32 %v2233, %v2233
  %v2426 = vmul.f32 %v2234, %v2234
  %v2427 = vmul.f32 %v2235, %v2235
  %v2428 = vmul.f32 %v2236, %v2236
  %v2429 = vmul.f32 %v2237, %v2237
  %v2430 = vmul.f32 %v2238, %v2238
  %v2431 = vmul.f32 %v2239, %v2239
  %v2432 = vmul.f32 %v2240, %v2240
  %v2433 = vmul.f32 %v2241, %v2241
  %v2434 = vmul.f32 %v2242, %v2242
  %v2435 = vmul.f32 %v2243, %v2243
  %v2436 = vmul.f32 %v2244, %v2244
  %v2437 = vmul.f32 %v2245, %v2245
  %v2438 = vmul.f32 %v2246, %v2246
  %v2439 = vmul.f32 %v2247, %v2247
  %v2440 = vmul.f32 %v2248, %v2248
  %v2441 = vmul.f32 %v2249, %v2249
  %v2442 = vmul.f32 %v2250, %v2250
  %v2443 = vmul.f32 %v2251, %v2251
  %v2444 = vmul.f32 %v2252, %v2252
  %v2445 = vmul.f32 %v2253, %v2253
  %v2446 = vmul.f32 %v2254, %v2254
  %v2447 = vmul.f32 %v2255, %v2255
  %v2448 = vmul.f32 %v2256, %v2256
  %v2449 = vmul.f32 %v2257, %v2257
  %v2450 = vmul.f32 %v2258, %v2258
  %v2451 = vmul.f32 %v2259, %v2259
  %v2452 = vmul.f32 %v2260, %v2260
  %v2453 = vmul.f32 %v2261, %v2261
  %v2454 = vmul.f32 %v2262, %v2262
  %v2455 = vmul.f32 %v2263, %v2263
  %v2456 = vmul.f32 %v2264, %v2264
  %v2457 = vsub.f32 %v2393, %v2425
  %v2458 = vsub.f32 %v2394, %v2426
  %v2459 = vsub.f32 %v2395, %v2427
  %v2460 = vsub.f32 %v2396, %v2428
  %v2461 = vsub.f32 %v2397, %v2429
  %v2462 = vsub.f32 %v2398, %v2430
  %v2463 = vsub.f32 %v2399, %v2431
  %v2464 = vsub.f32 %v2400, %v2432
  %v2465 = vsub.f32 %v2401, %v2433
  %v2466 = vsub.f32 %v2402, %v2434
  %v2467 = vsub.f32 %v2403, %v2435
  %v2468 = vsub.f32 %v2404, %v2436
  %v2469 = vsub.f32 %v2405, %v2437
  %v2470 = vsub.f32 %v2406, %v2438
  %v2471 = vsub.f32 %v2407, %v2439
  %v2472 = vsub.f32 %v2408, %v2440
  %v2473 = vsub.f32 %v2409, %v2441
  %v2474 = vsub.f32 %v2410, %v2442
  %v2475 = vsub.f32 %v2411, %v2443
  %v2476 = vsub.f32 %v2412, %v2444
  %v2477 = vsub.f32 %v2413, %v2445
  %v2478 = vsub.f32 %v2414, %v2446
  %v2479 = vsub.f32 %v2415, %v2447
  %v2480 = vsub.f32 %v2416, %v2448
  %v2481 = vsub.f32 %v2417, %v2449
  %v2482 = vsub.f32 %v2418, %v2450
  %v2483 = vsub.f32 %v2419, %v2451
  %v2484 = vsub.f32 %v2420, %v2452
  %v2485 = vsub.f32 %v2421, %v2453
  %v2486 = vsub.f32 %v2422, %v2454
  %v2487 = vsub.f32 %v2423, %v2455
  %v2488 = vsub.f32 %v2424, %v2456
  %v2489 = vmax.f32 %v2457, 0.0
  %v2490 = vmax.f32 %v2458, 0.0
  %v2491 = vmax.f32 %v2459, 0.0
  %v2492 = vmax.f32 %v2460, 0.0
  %v2493 = vmax.f32 %v2461, 0.0
  %v2494 = vmax.f32 %v2462, 0.0
  %v2495 = vmax.f32 %v2463, 0.0
  %v2496 = vmax.f32 %v2464, 0.0
  %v2497 = vmax.f32 %v2465, 0.0
  %v2498 = vmax.f32 %v2466, 0.0
  %v2499 = vmax.f32 %v2467, 0.0
  %v2500 = vmax.f32 %v2468, 0.0
  %v2501 = vmax.f32 %v2469, 0.0
  %v2502 = vmax.f32 %v2470, 0.0
  %v2503 = vmax.f32 %v2471, 0.0
  %v2504 = vmax.f32 %v2472, 0.0
  %v2505 = vmax.f32 %v2473, 0.0
  %v2506 = vmax.f32 %v2474, 0.0
  %v2507 = vmax.f32 %v2475, 0.0
  %v2508 = vmax.f32 %v2476, 0.0
  %v2509 = vmax.f32 %v2477, 0.0
  %v2510 = vmax.f32 %v2478, 0.0
  %v2511 = vmax.f32 %v2479, 0.0
  %v2512 = vmax.f32 %v2480, 0.0
  %v2513 = vmax.f32 %v2481, 0.0
  %v2514 = vmax.f32 %v2482, 0.0
  %v2515 = vmax.f32 %v2483, 0.0
  %v2516 = vmax.f32 %v2484, 0.0
  %v2517 = vmax.f32 %v2485, 0.0
  %v2518 = vmax.f32 %v2486, 0.0
  %v2519 = vmax.f32 %v2487, 0.0
  %v2520 = vmax.f32 %v2488, 0.0
  %v2521 = vsub.f32 %v2011, %v2233
  %v2522 = vsub.f32 %v2014, %v2234
  %v2523 = vsub.f32 %v2019, %v2235
  %v2524 = vsub.f32 %v2022, %v2236
  %v2525 = vsub.f32 %v2027, %v2237
  %v2526 = vsub.f32 %v2030, %v2238
  %v2527 = vsub.f32 %v2035, %v2239
  %v2528 = vsub.f32 %v2038, %v2240
  %v2529 = vsub.f32 %v2043, %v2241
  %v2530 = vsub.f32 %v2046, %v2242
  %v2531 = vsub.f32 %v2051, %v2243
  %v2532 = vsub.f32 %v2054, %v2244
  %v2533 = vsub.f32 %v2059, %v2245
  %v2534 = vsub.f32 %v2062, %v2246
  %v2535 = vsub.f32 %v2067, %v2247
  %v2536 = vsub.f32 %v2070, %v2248
  %v2537 = vsub.f32 %v2075, %v2249
  %v2538 = vsub.f32 %v2078, %v2250
  %v2539 = vsub.f32 %v2083, %v2251
  %v2540 = vsub.f32 %v2086, %v2252
  %v2541 = vsub.f32 %v2091, %v2253
  %v2542 = vsub.f32 %v2094, %v2254
  %v2543 = vsub.f32 %v2099, %v2255
  %v2544 = vsub.f32 %v2102, %v2256
  %v2545 = vsub.f32 %v2107, %v2257
  %v2546 = vsub.f32 %v2110, %v2258
  %v2547 = vsub.f32 %v2115, %v2259
  %v2548 = vsub.f32 %v2118, %v2260
  %v2549 = vsub.f32 %v2123, %v2261
  %v2550 = vsub.f32 %v2126, %v2262
  %v2551 = vsub.f32 %v2131, %v2263
  %v2552 = vsub.f32 %v2134, %v2264
  %v2553 = vadd.f32 %v2489, 1e-05
  %v2554 = vadd.f32 %v2490, 1e-05
  %v2555 = vadd.f32 %v2491, 1e-05
  %v2556 = vadd.f32 %v2492, 1e-05
  %v2557 = vadd.f32 %v2493, 1e-05
  %v2558 = vadd.f32 %v2494, 1e-05
  %v2559 = vadd.f32 %v2495, 1e-05
  %v2560 = vadd.f32 %v2496, 1e-05
  %v2561 = vadd.f32 %v2497, 1e-05
  %v2562 = vadd.f32 %v2498, 1e-05
  %v2563 = vadd.f32 %v2499, 1e-05
  %v2564 = vadd.f32 %v2500, 1e-05
  %v2565 = vadd.f32 %v2501, 1e-05
  %v2566 = vadd.f32 %v2502, 1e-05
  %v2567 = vadd.f32 %v2503, 1e-05
  %v2568 = vadd.f32 %v2504, 1e-05
  %v2569 = vadd.f32 %v2505, 1e-05
  %v2570 = vadd.f32 %v2506, 1e-05
  %v2571 = vadd.f32 %v2507, 1e-05
  %v2572 = vadd.f32 %v2508, 1e-05
  %v2573 = vadd.f32 %v2509, 1e-05
  %v2574 = vadd.f32 %v2510, 1e-05
  %v2575 = vadd.f32 %v2511, 1e-05
  %v2576 = vadd.f32 %v2512, 1e-05
  %v2577 = vadd.f32 %v2513, 1e-05
  %v2578 = vadd.f32 %v2514, 1e-05
  %v2579 = vadd.f32 %v2515, 1e-05
  %v2580 = vadd.f32 %v2516, 1e-05
  %v2581 = vadd.f32 %v2517, 1e-05
  %v2582 = vadd.f32 %v2518, 1e-05
  %v2583 = vadd.f32 %v2519, 1e-05
  %v2584 = vadd.f32 %v2520, 1e-05
  %v2585 = vrsqrt.pop %v2553
  %v2586 = vrsqrt.pop %v2554
  %v2587 = vrsqrt.pop %v2555
  %v2588 = vrsqrt.pop %v2556
  %v2589 = vrsqrt.pop %v2557
  %v2590 = vrsqrt.pop %v2558
  %v2591 = vrsqrt.pop %v2559
  %v2592 = vrsqrt.pop %v2560
  %v2593 = vrsqrt.pop %v2561
  %v2594 = vrsqrt.pop %v2562
  %v2595 = vrsqrt.pop %v2563
  %v2596 = vrsqrt.pop %v2564
  %v2597 = vrsqrt.pop %v2565
  %v2598 = vrsqrt.pop %v2566
  %v2599 = vrsqrt.pop %v2567
  %v2600 = vrsqrt.pop %v2568
  %v2601 = vrsqrt.pop %v2569
  %v2602 = vrsqrt.pop %v2570
  %v2603 = vrsqrt.pop %v2571
  %v2604 = vrsqrt.pop %v2572
  %v2605 = vrsqrt.pop %v2573
  %v2606 = vrsqrt.pop %v2574
  %v2607 = vrsqrt.pop %v2575
  %v2608 = vrsqrt.pop %v2576
  %v2609 = vrsqrt.pop %v2577
  %v2610 = vrsqrt.pop %v2578
  %v2611 = vrsqrt.pop %v2579
  %v2612 = vrsqrt.pop %v2580
  %v2613 = vrsqrt.pop %v2581
  %v2614 = vrsqrt.pop %v2582
  %v2615 = vrsqrt.pop %v2583
  %v2616 = vrsqrt.pop %v2584
  %v2617 = vmul.f32 %v2521, %v2585
  %v2618 = vmul.f32 %v2522, %v2586
  %v2619 = vmul.f32 %v2523, %v2587
  %v2620 = vmul.f32 %v2524, %v2588
  %v2621 = vmul.f32 %v2525, %v2589
  %v2622 = vmul.f32 %v2526, %v2590
  %v2623 = vmul.f32 %v2527, %v2591
  %v2624 = vmul.f32 %v2528, %v2592
  %v2625 = vmul.f32 %v2529, %v2593
  %v2626 = vmul.f32 %v2530, %v2594
  %v2627 = vmul.f32 %v2531, %v2595
  %v2628 = vmul.f32 %v2532, %v2596
  %v2629 = vmul.f32 %v2533, %v2597
  %v2630 = vmul.f32 %v2534, %v2598
  %v2631 = vmul.f32 %v2535, %v2599
  %v2632 = vmul.f32 %v2536, %v2600
  %v2633 = vmul.f32 %v2537, %v2601
  %v2634 = vmul.f32 %v2538, %v2602
  %v2635 = vmul.f32 %v2539, %v2603
  %v2636 = vmul.f32 %v2540, %v2604
  %v2637 = vmul.f32 %v2541, %v2605
  %v2638 = vmul.f32 %v2542, %v2606
  %v2639 = vmul.f32 %v2543, %v2607
  %v2640 = vmul.f32 %v2544, %v2608
  %v2641 = vmul.f32 %v2545, %v2609
  %v2642 = vmul.f32 %v2546, %v2610
  %v2643 = vmul.f32 %v2547, %v2611
  %v2644 = vmul.f32 %v2548, %v2612
  %v2645 = vmul.f32 %v2549, %v2613
  %v2646 = vmul.f32 %v2550, %v2614
  %v2647 = vmul.f32 %v2551, %v2615
  %v2648 = vmul.f32 %v2552, %v2616
  %v2649 = vlaneseq
  %v2650 = vshrl.u32 %v2649, 7
  %v2651 = vsub.s32 0, %v2650
  %v2652 = vrot.slane %v58, %v2651
  %v2653 = vmul.f32 %v2617, %v2652
  %v2654 = vmul.f32 %v2618, %v2652
  %v2655 = vmul.f32 %v2619, %v2652
  %v2656 = vmul.f32 %v2620, %v2652
  %v2657 = vmul.f32 %v2621, %v2652
  %v2658 = vmul.f32 %v2622, %v2652
  %v2659 = vmul.f32 %v2623, %v2652
  %v2660 = vmul.f32 %v2624, %v2652
  %v2661 = vmul.f32 %v2625, %v2652
  %v2662 = vmul.f32 %v2626, %v2652
  %v2663 = vmul.f32 %v2627, %v2652
  %v2664 = vmul.f32 %v2628, %v2652
  %v2665 = vmul.f32 %v2629, %v2652
  %v2666 = vmul.f32 %v2630, %v2652
  %v2667 = vmul.f32 %v2631, %v2652
  %v2668 = vmul.f32 %v2632, %v2652
  %v2669 = vmul.f32 %v2633, %v2652
  %v2670 = vmul.f32 %v2634, %v2652
  %v2671 = vmul.f32 %v2635, %v2652
  %v2672 = vmul.f32 %v2636, %v2652
  %v2673 = vmul.f32 %v2637, %v2652
  %v2674 = vmul.f32 %v2638, %v2652
  %v2675 = vmul.f32 %v2639, %v2652
  %v2676 = vmul.f32 %v2640, %v2652
  %v2677 = vmul.f32 %v2641, %v2652
  %v2678 = vmul.f32 %v2642, %v2652
  %v2679 = vmul.f32 %v2643, %v2652
  %v2680 = vmul.f32 %v2644, %v2652
  %v2681 = vmul.f32 %v2645, %v2652
  %v2682 = vmul.f32 %v2646, %v2652
  %v2683 = vmul.f32 %v2647, %v2652
  %v2684 = vmul.f32 %v2648, %v2652
  %v2685 = vlaneseq
  %v2686 = vshrl.u32 %v2685, 7
  %v2687 = vsub.s32 0, %v2686
  %v2688 = vrot.slane %v59, %v2687
  %v2689 = vadd.f32 %v2653, %v2688
  %v2690 = vadd.f32 %v2654, %v2688
  %v2691 = vadd.f32 %v2655, %v2688
  %v2692 = vadd.f32 %v2656, %v2688
  %v2693 = vadd.f32 %v2657, %v2688
  %v2694 = vadd.f32 %v2658, %v2688
  %v2695 = vadd.f32 %v2659, %v2688
  %v2696 = vadd.f32 %v2660, %v2688
  %v2697 = vadd.f32 %v2661, %v2688
  %v2698 = vadd.f32 %v2662, %v2688
  %v2699 = vadd.f32 %v2663, %v2688
  %v2700 = vadd.f32 %v2664, %v2688
  %v2701 = vadd.f32 %v2665, %v2688
  %v2702 = vadd.f32 %v2666, %v2688
  %v2703 = vadd.f32 %v2667, %v2688
  %v2704 = vadd.f32 %v2668, %v2688
  %v2705 = vadd.f32 %v2669, %v2688
  %v2706 = vadd.f32 %v2670, %v2688
  %v2707 = vadd.f32 %v2671, %v2688
  %v2708 = vadd.f32 %v2672, %v2688
  %v2709 = vadd.f32 %v2673, %v2688
  %v2710 = vadd.f32 %v2674, %v2688
  %v2711 = vadd.f32 %v2675, %v2688
  %v2712 = vadd.f32 %v2676, %v2688
  %v2713 = vadd.f32 %v2677, %v2688
  %v2714 = vadd.f32 %v2678, %v2688
  %v2715 = vadd.f32 %v2679, %v2688
  %v2716 = vadd.f32 %v2680, %v2688
  %v2717 = vadd.f32 %v2681, %v2688
  %v2718 = vadd.f32 %v2682, %v2688
  %v2719 = vadd.f32 %v2683, %v2688
  %v2720 = vadd.f32 %v2684, %v2688
  %v2721 = vpack.c.bf16 %v2690, %v2689
  %v2722 = vpack.c.bf16 %v2692, %v2691
  %v2723 = vpack.c.bf16 %v2694, %v2693
  %v2724 = vpack.c.bf16 %v2696, %v2695
  %v2725 = vpack.c.bf16 %v2698, %v2697
  %v2726 = vpack.c.bf16 %v2700, %v2699
  %v2727 = vpack.c.bf16 %v2702, %v2701
  %v2728 = vpack.c.bf16 %v2704, %v2703
  %v2729 = vpack.c.bf16 %v2706, %v2705
  %v2730 = vpack.c.bf16 %v2708, %v2707
  %v2731 = vpack.c.bf16 %v2710, %v2709
  %v2732 = vpack.c.bf16 %v2712, %v2711
  %v2733 = vpack.c.bf16 %v2714, %v2713
  %v2734 = vpack.c.bf16 %v2716, %v2715
  %v2735 = vpack.c.bf16 %v2718, %v2717
  %v2736 = vpack.c.bf16 %v2720, %v2719
  %2737 = vst.msk [vmem:[%s5] sm:$0xff] %vm176, %v2721
  %2738 = vst.msk [vmem:[%s5 + $0x8] sm:$0xff] %vm176, %v2722
  %2739 = vst.msk [vmem:[%s5 + $0x10] sm:$0xff] %vm176, %v2723
  %2740 = vst.msk [vmem:[%s5 + $0x18] sm:$0xff] %vm176, %v2724
  %2741 = vst.msk [vmem:[%s5 + $0x20] sm:$0xff] %vm176, %v2725
  %2742 = vst.msk [vmem:[%s5 + $0x28] sm:$0xff] %vm176, %v2726
  %2743 = vst.msk [vmem:[%s5 + $0x30] sm:$0xff] %vm176, %v2727
  %2744 = vst.msk [vmem:[%s5 + $0x38] sm:$0xff] %vm176, %v2728
  %2745 = vst.msk [vmem:[%s5 + $0x40] sm:$0xff] %vm176, %v2729
  %2746 = vst.msk [vmem:[%s5 + $0x48] sm:$0xff] %vm176, %v2730
  %2747 = vst.msk [vmem:[%s5 + $0x50] sm:$0xff] %vm176, %v2731
  %2748 = vst.msk [vmem:[%s5 + $0x58] sm:$0xff] %vm176, %v2732
  %2749 = vst.msk [vmem:[%s5 + $0x60] sm:$0xff] %vm176, %v2733
  %2750 = vst.msk [vmem:[%s5 + $0x68] sm:$0xff] %vm176, %v2734
  %2751 = vst.msk [vmem:[%s5 + $0x70] sm:$0xff] %vm176, %v2735
  %2752 = vst.msk [vmem:[%s5 + $0x78] sm:$0xff] %vm176, %v2736
  // Predicated region
  $region22: #{_lambda_.1} parent=0 // pred_check
    _
  $region23: #{_lambda_.1} parent=0 // pred_check_branch
    %2754 = sbr.rel (0) target = $region25
  $region24: #{_lambda_.1} parent=0 // pred_region
    _
  $region25: #{_lambda_.1} parent=0 // pred_fallthru
    _
  // Predicated region
  $region26: #{_lambda_.1} parent=0 // pred_check
    _
  $region27: #{_lambda_.1} parent=0 // pred_check_branch
    %2756 = sbr.rel (0) target = $region29
  $region28: #{_lambda_.1} parent=0 // pred_region
    _
  $region29: #{_lambda_.1} parent=0 // pred_fallthru
    _

</llo_original>
